<compile_context>
chip_gen: v6e
topology: v6e:2x2x1
jax: 0.10.0
libtpu: 0.0.40
codegen_flags: <defaults>
</compile_context>

<pallas_src>
import functools

import jax
import jax.numpy as jnp
from jax.experimental import pallas as pl
from jax.experimental.pallas import tpu as pltpu


def _round_up(x, m):
    return ((x + m - 1) // m) * m


def mlp_kernel(x_ref, w1_ref, b1_ref, w2_ref, b2_ref, w3_ref, b3_ref, o_ref,
               *, num_classes):
    # x arrives in its native dtype (f32); cast to bf16 in-register for the MXU.
    x = x_ref[...].astype(jnp.bfloat16)

    # Layer 1: (TB, 784)bf16 @ (784, 512)bf16 -> f32 acc, bias + ReLU in f32
    h = jnp.dot(x, w1_ref[...], preferred_element_type=jnp.float32)
    h = jnp.maximum(h + b1_ref[...], 0.0)

    # Layer 2: (TB, 512) @ (512, 128)
    h = jnp.dot(h.astype(jnp.bfloat16), w2_ref[...],
                preferred_element_type=jnp.float32)
    h = jnp.maximum(h + b2_ref[...], 0.0)

    # Layer 3: (TB, 128) @ (128, 128)  (ReLU on the last layer too, matching
    # the PyTorch loop which applies F.relu to every layer before softmax)
    h = jnp.dot(h.astype(jnp.bfloat16), w3_ref[...],
                preferred_element_type=jnp.float32)
    h = jnp.maximum(h + b3_ref[...], 0.0)

    # Mask the padded logit lanes (cols >= num_classes) so they don't pollute
    # the softmax, then softmax over dim=1 in f32; store as bf16.
    col = jax.lax.broadcasted_iota(jnp.int32, h.shape, dimension=1)
    h = jnp.where(col < num_classes, h, -jnp.inf)
    m = jnp.max(h, axis=1, keepdims=True)
    e = jnp.exp(h - m)
    s = jnp.sum(e, axis=1, keepdims=True)
    o_ref[...] = (e * pl.reciprocal(s, approx=True)).astype(o_ref.dtype)


def _choose_tile_b(B):
    """Batch tile: >= 2 programs when possible (v7x megacore), 512 when large."""
    b8 = _round_up(B, 8)
    if b8 >= 1024:
        return 512
    if b8 >= 16:
        return _round_up(pl.cdiv(b8, 2), 8)
    return b8


def mlp_forward(x, padded_params, *, num_classes=10):
    """x: (B, 784) f32 or bf16. padded_params: bf16 weights / f32 biases, lane-padded."""
    (w1, b1), (w2, b2), (w3, b3) = padded_params
    B, d_in = x.shape
    h1 = w1.shape[1]
    h2 = w2.shape[1]
    out_pad = w3.shape[1]

    tile_b = _choose_tile_b(B)
    b_pad = _round_up(B, tile_b)
    if b_pad != B:
        # Only pads the (rare) ragged tail tile; no dtype-cast pass over x.
        x = jnp.pad(x, ((0, b_pad - B), (0, 0)))

    resident = lambda shape: pl.BlockSpec(shape, lambda i: (0, 0))

    weight_bytes = sum(int(a.size) * a.dtype.itemsize
                       for a in (w1, b1, w2, b2, w3, b3))
    cost = pl.CostEstimate(
        flops=2 * b_pad * (d_in * h1 + h1 * h2 + h2 * out_pad),
        transcendentals=b_pad * out_pad,
        bytes_accessed=int(x.size) * x.dtype.itemsize
        + b_pad * out_pad * 2
        + weight_bytes,
    )

    out = pl.pallas_call(
        functools.partial(mlp_kernel, num_classes=num_classes),
        out_shape=jax.ShapeDtypeStruct((b_pad, out_pad), jnp.bfloat16),
        grid=(b_pad // tile_b,),
        in_specs=[
            pl.BlockSpec((tile_b, d_in), lambda i: (i, 0)),   # x: tiled over batch
            resident(w1.shape), resident(b1.shape),           # weights/biases stay
            resident(w2.shape), resident(b2.shape),           # VMEM-resident
            resident(w3.shape), resident(b3.shape),
        ],
        out_specs=pl.BlockSpec((tile_b, out_pad), lambda i: (i, 0)),
        compiler_params=pltpu.CompilerParams(
            dimension_semantics=("parallel",),
        ),
        cost_estimate=cost,
    )(x, w1, b1, w2, b2, w3, b3)

    return out[:B, :num_classes]


def init_params(key, sizes):
    """PyTorch nn.Linear-style init (uniform +-1/sqrt(fan_in)), f32, logical sizes."""
    params = []
    for i in range(len(sizes) - 1):
        fan_in, fan_out = sizes[i], sizes[i + 1]
        key, kw, kb = jax.random.split(key, 3)
        bound = 1.0 / jnp.sqrt(fan_in)
        w = jax.random.uniform(kw, (fan_in, fan_out), jnp.float32, -bound, bound)
        b = jax.random.uniform(kb, (1, fan_out), jnp.float32, -bound, bound)
        params.append((w, b))
    return params


def pad_params(params):
    """Zero-pad every feature dim up to a multiple of 128; weights -> bf16."""
    padded = []
    prev_out_pad = None
    for (w, b) in params:
        fi, fo = w.shape
        fi_pad = prev_out_pad if prev_out_pad is not None else fi
        fo_pad = _round_up(fo, 128)
        w_p = jnp.zeros((fi_pad, fo_pad), jnp.float32).at[:fi, :fo].set(w)
        b_p = jnp.zeros((1, fo_pad), jnp.float32).at[:, :fo].set(b)
        padded.append((w_p.astype(jnp.bfloat16), b_p))
        prev_out_pad = fo_pad
    return padded


def mlp_reference(x, params):
    """Pure-JAX reference mirroring the kernel math (bf16 matmul, f32 softmax)."""
    h = x
    for (w, b) in params:
        h = jnp.dot(h.astype(jnp.bfloat16), w.astype(jnp.bfloat16),
                    preferred_element_type=jnp.float32)
        h = jnp.maximum(h + b, 0.0)
    return jax.nn.softmax(h, axis=1)


if __name__ == "__main__":
    key = jax.random.PRNGKey(0)
    key, kx = jax.random.split(key)

    batch = 8
    sizes = [784, 500, 128, 10]  # input_size + layers + output_size

    x = jax.random.normal(kx, (batch, sizes[0]), jnp.float32)
    params = init_params(key, sizes)
    padded_params = pad_params(params)

    out = mlp_forward(x, padded_params, num_classes=sizes[-1])
    jax.block_until_ready(out)

    # sanity: shape, softmax rows sum to ~1, and matches a pure-JAX reference
    out_f32 = out.astype(jnp.float32)
    assert out.shape == (batch, sizes[-1])
    assert jnp.allclose(jnp.sum(out_f32, axis=1), 1.0, atol=2e-2)
    ref = mlp_reference(x, params)
    assert jnp.allclose(out_f32, ref, rtol=2e-2, atol=1e-2)

    print("KERNEL_OK")
</pallas_src>

<mosaic_0001>
module attributes {stable_mosaic.version = 11 : i64} {
  func.func @mlp_kernel(%arg0: i32, %arg1: memref<8x784xf32, #tpu.memory_space<vmem>>, %arg2: memref<784x512xbf16, #tpu.memory_space<vmem>>, %arg3: memref<1x512xf32, #tpu.memory_space<vmem>>, %arg4: memref<512x128xbf16, #tpu.memory_space<vmem>>, %arg5: memref<1x128xf32, #tpu.memory_space<vmem>>, %arg6: memref<128x128xbf16, #tpu.memory_space<vmem>>, %arg7: memref<1x128xf32, #tpu.memory_space<vmem>>, %arg8: memref<8x128xbf16, #tpu.memory_space<vmem>>) attributes {dimension_semantics = [#tpu.dimension_semantics<parallel>], iteration_bounds = array<i64: 1>, scalar_prefetch = 0 : i64, scratch_operands = 0 : i64, tpu.core_type = #tpu.core_type<tc>, window_params = [{transform_indices = @transform_0, window_bounds = array<i64: 8, 784>}, {pipeline_mode = #tpu.pipeline_mode<synchronous>, transform_indices = @transform_1, window_bounds = array<i64: 784, 512>}, {pipeline_mode = #tpu.pipeline_mode<synchronous>, transform_indices = @transform_2, window_bounds = array<i64: 1, 512>}, {pipeline_mode = #tpu.pipeline_mode<synchronous>, transform_indices = @transform_3, window_bounds = array<i64: 512, 128>}, {pipeline_mode = #tpu.pipeline_mode<synchronous>, transform_indices = @transform_4, window_bounds = array<i64: 1, 128>}, {pipeline_mode = #tpu.pipeline_mode<synchronous>, transform_indices = @transform_5, window_bounds = array<i64: 128, 128>}, {pipeline_mode = #tpu.pipeline_mode<synchronous>, transform_indices = @transform_6, window_bounds = array<i64: 1, 128>}, {transform_indices = @transform_7, window_bounds = array<i64: 8, 128>}]} {
    %c0 = arith.constant 0 : index
    %c0_0 = arith.constant 0 : index
    %0 = vector.load %arg1[%c0, %c0_0] : memref<8x784xf32, #tpu.memory_space<vmem>>, vector<8x784xf32>
    %1 = arith.truncf %0 : vector<8x784xf32> to vector<8x784xbf16>
    %c0_1 = arith.constant 0 : index
    %c0_2 = arith.constant 0 : index
    %2 = vector.load %arg2[%c0_1, %c0_2] : memref<784x512xbf16, #tpu.memory_space<vmem>>, vector<784x512xbf16>
    %cst = arith.constant dense<0.000000e+00> : vector<8x512xf32>
    %3 = tpu.matmul %1, %2, %cst {dimension_numbers = #tpu.dot_dimension_numbers<[1], [0], [0], [1], [0, 0, 1, 1], [], []>} : vector<8x784xbf16>, vector<784x512xbf16>, vector<8x512xf32> -> vector<8x512xf32>
    %c0_3 = arith.constant 0 : index
    %c0_4 = arith.constant 0 : index
    %4 = vector.load %arg3[%c0_3, %c0_4] : memref<1x512xf32, #tpu.memory_space<vmem>>, vector<1x512xf32>
    %5 = vector.broadcast %4 : vector<1x512xf32> to vector<8x512xf32>
    %6 = arith.addf %3, %5 : vector<8x512xf32>
    %cst_5 = arith.constant 0.000000e+00 : f32
    %7 = vector.broadcast %cst_5 : f32 to vector<8x512xf32>
    %8 = arith.maximumf %6, %7 : vector<8x512xf32>
    %9 = arith.truncf %8 : vector<8x512xf32> to vector<8x512xbf16>
    %c0_6 = arith.constant 0 : index
    %c0_7 = arith.constant 0 : index
    %10 = vector.load %arg4[%c0_6, %c0_7] : memref<512x128xbf16, #tpu.memory_space<vmem>>, vector<512x128xbf16>
    %cst_8 = arith.constant dense<0.000000e+00> : vector<8x128xf32>
    %11 = tpu.matmul %9, %10, %cst_8 {dimension_numbers = #tpu.dot_dimension_numbers<[1], [0], [0], [1], [0, 0, 1, 1], [], []>} : vector<8x512xbf16>, vector<512x128xbf16>, vector<8x128xf32> -> vector<8x128xf32>
    %c0_9 = arith.constant 0 : index
    %c0_10 = arith.constant 0 : index
    %12 = vector.load %arg5[%c0_9, %c0_10] : memref<1x128xf32, #tpu.memory_space<vmem>>, vector<1x128xf32>
    %13 = vector.broadcast %12 : vector<1x128xf32> to vector<8x128xf32>
    %14 = arith.addf %11, %13 : vector<8x128xf32>
    %cst_11 = arith.constant 0.000000e+00 : f32
    %15 = vector.broadcast %cst_11 : f32 to vector<8x128xf32>
    %16 = arith.maximumf %14, %15 : vector<8x128xf32>
    %17 = arith.truncf %16 : vector<8x128xf32> to vector<8x128xbf16>
    %c0_12 = arith.constant 0 : index
    %c0_13 = arith.constant 0 : index
    %18 = vector.load %arg6[%c0_12, %c0_13] : memref<128x128xbf16, #tpu.memory_space<vmem>>, vector<128x128xbf16>
    %cst_14 = arith.constant dense<0.000000e+00> : vector<8x128xf32>
    %19 = tpu.matmul %17, %18, %cst_14 {dimension_numbers = #tpu.dot_dimension_numbers<[1], [0], [0], [1], [0, 0, 1, 1], [], []>} : vector<8x128xbf16>, vector<128x128xbf16>, vector<8x128xf32> -> vector<8x128xf32>
    %c0_15 = arith.constant 0 : index
    %c0_16 = arith.constant 0 : index
    %20 = vector.load %arg7[%c0_15, %c0_16] : memref<1x128xf32, #tpu.memory_space<vmem>>, vector<1x128xf32>
    %21 = vector.broadcast %20 : vector<1x128xf32> to vector<8x128xf32>
    %22 = arith.addf %19, %21 : vector<8x128xf32>
    %cst_17 = arith.constant 0.000000e+00 : f32
    %23 = vector.broadcast %cst_17 : f32 to vector<8x128xf32>
    %24 = arith.maximumf %22, %23 : vector<8x128xf32>
    %25 = tpu.iota {dimensions = array<i32: 1>} : vector<8x128xi32>
    %c10_i32 = arith.constant 10 : i32
    %26 = vector.broadcast %c10_i32 : i32 to vector<8x128xi32>
    %27 = arith.cmpi slt, %25, %26 : vector<8x128xi32>
    %cst_18 = arith.constant 0xFF800000 : f32
    %28 = vector.broadcast %cst_18 : f32 to vector<8x128xf32>
    %29 = arith.select %27, %24, %28 : vector<8x128xi1>, vector<8x128xf32>
    %cst_19 = arith.constant dense<0xFF800000> : vector<8xf32>
    %30 = vector.multi_reduction <maximumf>, %29, %cst_19 [1] : vector<8x128xf32> to vector<8xf32>
    %31 = vector.shape_cast %30 : vector<8xf32> to vector<8x1xf32>
    %32 = vector.broadcast %31 : vector<8x1xf32> to vector<8x128xf32>
    %33 = arith.subf %29, %32 : vector<8x128xf32>
    %34 = math.exp %33 : vector<8x128xf32>
    %cst_20 = arith.constant dense<0.000000e+00> : vector<8xf32>
    %35 = vector.multi_reduction <add>, %34, %cst_20 [1] : vector<8x128xf32> to vector<8xf32>
    %36 = vector.shape_cast %35 : vector<8xf32> to vector<8x1xf32>
    %37 = tpu.reciprocal %36 {approx = true} : vector<8x1xf32> -> vector<8x1xf32>
    %38 = vector.broadcast %37 : vector<8x1xf32> to vector<8x128xf32>
    %39 = arith.mulf %34, %38 : vector<8x128xf32>
    %40 = arith.truncf %39 : vector<8x128xf32> to vector<8x128xbf16>
    %c0_21 = arith.constant 0 : index
    %c0_22 = arith.constant 0 : index
    %41 = vector.load %arg8[%c0_21, %c0_22] : memref<8x128xbf16, #tpu.memory_space<vmem>>, vector<8x128xbf16>
    tpu.vector_store %arg8[%c0_21, %c0_22], %40 {strides = array<i32>} : memref<8x128xbf16, #tpu.memory_space<vmem>>, vector<8x128xbf16>,
    return
  }
  func.func @transform_0(%arg0: i32) -> (i32, i32) {
    %c0_i32 = arith.constant 0 : i32
    %c0_i32_0 = arith.constant 0 : i32
    return %arg0, %c0_i32 : i32, i32
  }
  func.func @transform_1(%arg0: i32) -> (i32, i32) {
    %c0_i32 = arith.constant 0 : i32
    %c0_i32_0 = arith.constant 0 : i32
    %c0_i32_1 = arith.constant 0 : i32
    return %c0_i32, %c0_i32_0 : i32, i32
  }
  func.func @transform_2(%arg0: i32) -> (i32, i32) {
    %c0_i32 = arith.constant 0 : i32
    %c0_i32_0 = arith.constant 0 : i32
    %c0_i32_1 = arith.constant 0 : i32
    return %c0_i32, %c0_i32_0 : i32, i32
  }
  func.func @transform_3(%arg0: i32) -> (i32, i32) {
    %c0_i32 = arith.constant 0 : i32
    %c0_i32_0 = arith.constant 0 : i32
    %c0_i32_1 = arith.constant 0 : i32
    return %c0_i32, %c0_i32_0 : i32, i32
  }
  func.func @transform_4(%arg0: i32) -> (i32, i32) {
    %c0_i32 = arith.constant 0 : i32
    %c0_i32_0 = arith.constant 0 : i32
    %c0_i32_1 = arith.constant 0 : i32
    return %c0_i32, %c0_i32_0 : i32, i32
  }
  func.func @transform_5(%arg0: i32) -> (i32, i32) {
    %c0_i32 = arith.constant 0 : i32
    %c0_i32_0 = arith.constant 0 : i32
    %c0_i32_1 = arith.constant 0 : i32
    return %c0_i32, %c0_i32_0 : i32, i32
  }
  func.func @transform_6(%arg0: i32) -> (i32, i32) {
    %c0_i32 = arith.constant 0 : i32
    %c0_i32_0 = arith.constant 0 : i32
    %c0_i32_1 = arith.constant 0 : i32
    return %c0_i32, %c0_i32_0 : i32, i32
  }
  func.func @transform_7(%arg0: i32) -> (i32, i32) {
    %c0_i32 = arith.constant 0 : i32
    %c0_i32_0 = arith.constant 0 : i32
    return %arg0, %c0_i32 : i32, i32
  }
}

</mosaic_0001>

<llo_original>
// kernel: tpu_custom_call.1
$region0: #{tpu_custom_call.1}
  #allocation0 [shape = 'u32[]', space=smem, size = 0x4, offset = 0x4, fixed_abs, tag = 'smem constant byte address 0x4 - core index']
  #allocation1 [shape = 'u32[144,128]{1,0:T(1,128)}', space=vmem, size = 0x12000, scoped, tag = 'internal scratch']
  %s0 = inlined_call_operand.hbm [shape: f32[8,784], index: 0, kind: input, shape index: {}]
  %s1 = inlined_call_operand.hbm [shape: bf16[784,512], index: 1, kind: input, shape index: {}]
  %s2 = inlined_call_operand.hbm [shape: f32[1,512], index: 2, kind: input, shape index: {}]
  %s3 = inlined_call_operand.hbm [shape: bf16[512,128], index: 3, kind: input, shape index: {}]
  %s4 = inlined_call_operand.vmem [shape: f32[1,128], index: 4, kind: input, shape index: {}]
  %s5 = inlined_call_operand.hbm [shape: bf16[128,128], index: 5, kind: input, shape index: {}]
  %s6 = inlined_call_operand.vmem [shape: f32[1,128], index: 6, kind: input, shape index: {}]
  %s7 = inlined_call_operand.hbm [shape: bf16[8,128], index: 7, kind: output, shape index: {}]
  %s8 = sld [smem:[#allocation0]]
  $region58: #{tpu_custom_call.1} parent=0
    _
  %s10 = ssub.s32 1, %s8
  %s11 = scalar_select 0, %s10, %s8
  $region1: #{tpu_custom_call.1} parent=0
    #allocation2 [shape = 'u8[28672]{0}', space=vmem, size = 0x7000, scoped, tag = 'input window, operand 0, single buffered']
    #allocation3 [shape = 's32[1]{0}', space=sflag, size = 0x4, scoped, tag = 'scoped memory for tpu_custom_call.1']
    #allocation4 [shape = 's32[1]{0}', space=sflag, size = 0x4, scoped, tag = 'scoped memory for tpu_custom_call.1']
    #allocation5 [shape = 'u8[802816]{0}', space=vmem, size = 0xc4000, scoped, tag = 'input window, operand 1, single buffered']
    #allocation6 [shape = 's32[1]{0}', space=sflag, size = 0x4, scoped, tag = 'scoped memory for tpu_custom_call.1']
    #allocation7 [shape = 'u8[2048]{0}', space=vmem, size = 0x800, scoped, tag = 'input window, operand 2, single buffered']
    #allocation8 [shape = 'u8[131072]{0}', space=vmem, size = 0x20000, scoped, tag = 'input window, operand 3, single buffered']
    #allocation9 [shape = 's32[1]{0}', space=sflag, size = 0x4, scoped, tag = 'scoped memory for tpu_custom_call.1']
    #allocation10 [shape = 'u8[32768]{0}', space=vmem, size = 0x8000, scoped, tag = 'input window, operand 5, single buffered']
    #allocation11 [shape = 'u8[2048]{0}', space=vmem, size = 0x800, scoped, tag = 'output window, operand 0, single buffered']
    %12 = vsyncpa [#allocation3], 0
    %13 = vsyncpa [#allocation6], 0
    %14 = vsyncpa [#allocation9], 0
    %15 = vsyncpa [#allocation4], 0
    // Predicated region
    $region2: #{tpu_custom_call.1} parent=1 // pred_check
      _
    $region3: #{tpu_custom_call.1} parent=1 // pred_check_branch
      %17 = sbr.rel (0) target = $region5
    $region4: #{tpu_custom_call.1} parent=1 // pred_region
      %s19 = ssub.s32 896, 896
      %20 = vsyncadd [#allocation3], %s19
      %s22 = sshll.u32 [#allocation2], 4
      %s23 = int_to_ptr.vmem [resolvable:$true] %s22
      %25 = dma.hbm_to_vmem [thread:$0]  %s0, 896, %s23, [#allocation3]
    $region5: #{tpu_custom_call.1} parent=1 // pred_fallthru
      _
    // Predicated region
    $region6: #{tpu_custom_call.1} parent=1 // pred_check
      _
    $region7: #{tpu_custom_call.1} parent=1 // pred_check_branch
      %27 = sbr.rel (0) target = $region9
    $region8: #{tpu_custom_call.1} parent=1 // pred_region
      %s29 = ssub.s32 25088, 25088
      %30 = vsyncadd [#allocation6], %s29
      %s31 = sshll.u32 [#allocation5], 4
      %s32 = int_to_ptr.vmem [resolvable:$true] %s31
      %37 = dma.hbm_to_vmem [thread:$0]  %s1, 25088, %s32, [#allocation6], 256, 256, 16
    $region9: #{tpu_custom_call.1} parent=1 // pred_fallthru
      _
    // Predicated region
    $region10: #{tpu_custom_call.1} parent=1 // pred_check
      _
    $region11: #{tpu_custom_call.1} parent=1 // pred_check_branch
      %39 = sbr.rel (0) target = $region13
    $region12: #{tpu_custom_call.1} parent=1 // pred_region
      %s41 = ssub.s32 64, 64
      %42 = vsyncadd [#allocation6], %s41
      %s44 = sshll.u32 [#allocation7], 4
      %s45 = int_to_ptr.vmem [resolvable:$true] %s44
      %47 = dma.hbm_to_vmem [thread:$0]  %s2, 64, %s45, [#allocation6]
    $region13: #{tpu_custom_call.1} parent=1 // pred_fallthru
      _
    // Predicated region
    $region14: #{tpu_custom_call.1} parent=1 // pred_check
      _
    $region15: #{tpu_custom_call.1} parent=1 // pred_check_branch
      %49 = sbr.rel (0) target = $region17
    $region16: #{tpu_custom_call.1} parent=1 // pred_region
      %s51 = ssub.s32 4096, 4096
      %52 = vsyncadd [#allocation9], %s51
      %s53 = sshll.u32 [#allocation8], 4
      %s54 = int_to_ptr.vmem [resolvable:$true] %s53
      %59 = dma.hbm_to_vmem [thread:$0]  %s3, 4096, %s54, [#allocation9], 64, 64, 4
    $region17: #{tpu_custom_call.1} parent=1 // pred_fallthru
      _
    // Predicated region
    $region18: #{tpu_custom_call.1} parent=1 // pred_check
      _
    $region19: #{tpu_custom_call.1} parent=1 // pred_check_branch
      %61 = sbr.rel (0) target = $region21
    $region20: #{tpu_custom_call.1} parent=1 // pred_region
      _
    $region21: #{tpu_custom_call.1} parent=1 // pred_fallthru
      _
    // Predicated region
    $region22: #{tpu_custom_call.1} parent=1 // pred_check
      _
    $region23: #{tpu_custom_call.1} parent=1 // pred_check_branch
      %63 = sbr.rel (0) target = $region25
    $region24: #{tpu_custom_call.1} parent=1 // pred_region
      %s65 = ssub.s32 1024, 1024
      %66 = vsyncadd [#allocation9], %s65
      %s67 = sshll.u32 [#allocation10], 4
      %s68 = int_to_ptr.vmem [resolvable:$true] %s67
      %73 = dma.hbm_to_vmem [thread:$0]  %s5, 1024, %s68, [#allocation9], 64, 64, 4
    $region25: #{tpu_custom_call.1} parent=1 // pred_fallthru
      _
    // Predicated region
    $region26: #{tpu_custom_call.1} parent=1 // pred_check
      _
    $region27: #{tpu_custom_call.1} parent=1 // pred_check_branch
      %75 = sbr.rel (0) target = $region29
    $region28: #{tpu_custom_call.1} parent=1 // pred_region
      _
    $region29: #{tpu_custom_call.1} parent=1 // pred_fallthru
      _
    // Predicated region
    $region30: #{tpu_custom_call.1} parent=1 // pred_check
      _
    $region31: #{tpu_custom_call.1} parent=1 // pred_check_branch
      %77 = sbr.rel (0) target = $region33
    $region32: #{tpu_custom_call.1} parent=1 // pred_region
      %78 = dma.done [#allocation3], 896
    $region33: #{tpu_custom_call.1} parent=1 // pred_fallthru
      _
    // Predicated region
    $region34: #{tpu_custom_call.1} parent=1 // pred_check
      _
    $region35: #{tpu_custom_call.1} parent=1 // pred_check_branch
      %80 = sbr.rel (0) target = $region37
    $region36: #{tpu_custom_call.1} parent=1 // pred_region
      %81 = dma.done [#allocation6], 25088
    $region37: #{tpu_custom_call.1} parent=1 // pred_fallthru
      _
    // Predicated region
    $region38: #{tpu_custom_call.1} parent=1 // pred_check
      _
    $region39: #{tpu_custom_call.1} parent=1 // pred_check_branch
      %83 = sbr.rel (0) target = $region41
    $region40: #{tpu_custom_call.1} parent=1 // pred_region
      %84 = dma.done [#allocation6], 64
    $region41: #{tpu_custom_call.1} parent=1 // pred_fallthru
      _
    // Predicated region
    $region42: #{tpu_custom_call.1} parent=1 // pred_check
      _
    $region43: #{tpu_custom_call.1} parent=1 // pred_check_branch
      %86 = sbr.rel (0) target = $region45
    $region44: #{tpu_custom_call.1} parent=1 // pred_region
      %87 = dma.done [#allocation9], 4096
    $region45: #{tpu_custom_call.1} parent=1 // pred_fallthru
      _
    // Predicated region
    $region46: #{tpu_custom_call.1} parent=1 // pred_check
      _
    $region47: #{tpu_custom_call.1} parent=1 // pred_check_branch
      %89 = sbr.rel (0) target = $region49
    $region48: #{tpu_custom_call.1} parent=1 // pred_region
      %90 = dma.done [#allocation9], 1024
    $region49: #{tpu_custom_call.1} parent=1 // pred_fallthru
      _
    %v92 = vld [vmem:[#allocation2] sm:$0xff]
    %v93 = vld [vmem:[#allocation2 + $0x8] sm:$0xff]
    %v94 = vld [vmem:[#allocation2 + $0x10] sm:$0xff]
    %v95 = vld [vmem:[#allocation2 + $0x18] sm:$0xff]
    %v96 = vld [vmem:[#allocation2 + $0x20] sm:$0xff]
    %v97 = vld [vmem:[#allocation2 + $0x28] sm:$0xff]
    %v98 = vld [vmem:[#allocation2 + $0x30] sm:$0xff]
    %v99 = vpack.c.bf16 %v92, %v92
    %v100 = vpack.c.bf16 %v93, %v93
    %v101 = vpack.c.bf16 %v94, %v94
    %v102 = vpack.c.bf16 %v95, %v95
    %v103 = vpack.c.bf16 %v96, %v96
    %v104 = vpack.c.bf16 %v97, %v97
    %v105 = vpack.c.bf16 %v98, %v98
    %v106 = vld [vmem:[#allocation5] sm:$0xff]
    %v107 = vld [vmem:[#allocation5 + $0x8] sm:$0xff]
    %v108 = vld [vmem:[#allocation5 + $0x10] sm:$0xff]
    %v109 = vld [vmem:[#allocation5 + $0x18] sm:$0xff]
    %v110 = vld [vmem:[#allocation5 + $0x20] sm:$0xff]
    %v111 = vld [vmem:[#allocation5 + $0x28] sm:$0xff]
    %v112 = vld [vmem:[#allocation5 + $0x30] sm:$0xff]
    %v113 = vld [vmem:[#allocation5 + $0x38] sm:$0xff]
    %v114 = vld [vmem:[#allocation5 + $0x40] sm:$0xff]
    %v115 = vld [vmem:[#allocation5 + $0x48] sm:$0xff]
    %v116 = vld [vmem:[#allocation5 + $0x50] sm:$0xff]
    %v117 = vld [vmem:[#allocation5 + $0x58] sm:$0xff]
    %v118 = vld [vmem:[#allocation5 + $0x60] sm:$0xff]
    %v119 = vld [vmem:[#allocation5 + $0x68] sm:$0xff]
    %v120 = vld [vmem:[#allocation5 + $0x70] sm:$0xff]
    %v121 = vld [vmem:[#allocation5 + $0x78] sm:$0xff]
    %v122 = vld [vmem:[#allocation5 + $0x80] sm:$0xff]
    %v123 = vld [vmem:[#allocation5 + $0x88] sm:$0xff]
    %v124 = vld [vmem:[#allocation5 + $0x90] sm:$0xff]
    %v125 = vld [vmem:[#allocation5 + $0x98] sm:$0xff]
    %v126 = vld [vmem:[#allocation5 + $0xa0] sm:$0xff]
    %v127 = vld [vmem:[#allocation5 + $0xa8] sm:$0xff]
    %v128 = vld [vmem:[#allocation5 + $0xb0] sm:$0xff]
    %v129 = vld [vmem:[#allocation5 + $0xb8] sm:$0xff]
    %v130 = vld [vmem:[#allocation5 + $0xc0] sm:$0xff]
    %v131 = vld [vmem:[#allocation5 + $0xc8] sm:$0xff]
    %v132 = vld [vmem:[#allocation5 + $0xd0] sm:$0xff]
    %v133 = vld [vmem:[#allocation5 + $0xd8] sm:$0xff]
    %v134 = vld [vmem:[#allocation5 + $0xe0] sm:$0xff]
    %v135 = vld [vmem:[#allocation5 + $0xe8] sm:$0xff]
    %v136 = vld [vmem:[#allocation5 + $0xf0] sm:$0xff]
    %v137 = vld [vmem:[#allocation5 + $0xf8] sm:$0xff]
    %v138 = vld [vmem:[#allocation5 + $0x100] sm:$0xff]
    %v139 = vld [vmem:[#allocation5 + $0x108] sm:$0xff]
    %v140 = vld [vmem:[#allocation5 + $0x110] sm:$0xff]
    %v141 = vld [vmem:[#allocation5 + $0x118] sm:$0xff]
    %v142 = vld [vmem:[#allocation5 + $0x120] sm:$0xff]
    %v143 = vld [vmem:[#allocation5 + $0x128] sm:$0xff]
    %v144 = vld [vmem:[#allocation5 + $0x130] sm:$0xff]
    %v145 = vld [vmem:[#allocation5 + $0x138] sm:$0xff]
    %v146 = vld [vmem:[#allocation5 + $0x140] sm:$0xff]
    %v147 = vld [vmem:[#allocation5 + $0x148] sm:$0xff]
    %v148 = vld [vmem:[#allocation5 + $0x150] sm:$0xff]
    %v149 = vld [vmem:[#allocation5 + $0x158] sm:$0xff]
    %v150 = vld [vmem:[#allocation5 + $0x160] sm:$0xff]
    %v151 = vld [vmem:[#allocation5 + $0x168] sm:$0xff]
    %v152 = vld [vmem:[#allocation5 + $0x170] sm:$0xff]
    %v153 = vld [vmem:[#allocation5 + $0x178] sm:$0xff]
    %v154 = vld [vmem:[#allocation5 + $0x180] sm:$0xff]
    %v155 = vld [vmem:[#allocation5 + $0x188] sm:$0xff]
    %v156 = vld [vmem:[#allocation5 + $0x190] sm:$0xff]
    %v157 = vld [vmem:[#allocation5 + $0x198] sm:$0xff]
    %v158 = vld [vmem:[#allocation5 + $0x1a0] sm:$0xff]
    %v159 = vld [vmem:[#allocation5 + $0x1a8] sm:$0xff]
    %v160 = vld [vmem:[#allocation5 + $0x1b0] sm:$0xff]
    %v161 = vld [vmem:[#allocation5 + $0x1b8] sm:$0xff]
    %v162 = vld [vmem:[#allocation5 + $0x1c0] sm:$0xff]
    %v163 = vld [vmem:[#allocation5 + $0x1c8] sm:$0xff]
    %v164 = vld [vmem:[#allocation5 + $0x1d0] sm:$0xff]
    %v165 = vld [vmem:[#allocation5 + $0x1d8] sm:$0xff]
    %v166 = vld [vmem:[#allocation5 + $0x1e0] sm:$0xff]
    %v167 = vld [vmem:[#allocation5 + $0x1e8] sm:$0xff]
    %v168 = vld [vmem:[#allocation5 + $0x1f0] sm:$0xff]
    %v169 = vld [vmem:[#allocation5 + $0x1f8] sm:$0xff]
    %v170 = vld [vmem:[#allocation5 + $0x200] sm:$0xff]
    %v171 = vld [vmem:[#allocation5 + $0x208] sm:$0xff]
    %v172 = vld [vmem:[#allocation5 + $0x210] sm:$0xff]
    %v173 = vld [vmem:[#allocation5 + $0x218] sm:$0xff]
    %v174 = vld [vmem:[#allocation5 + $0x220] sm:$0xff]
    %v175 = vld [vmem:[#allocation5 + $0x228] sm:$0xff]
    %v176 = vld [vmem:[#allocation5 + $0x230] sm:$0xff]
    %v177 = vld [vmem:[#allocation5 + $0x238] sm:$0xff]
    %v178 = vld [vmem:[#allocation5 + $0x240] sm:$0xff]
    %v179 = vld [vmem:[#allocation5 + $0x248] sm:$0xff]
    %v180 = vld [vmem:[#allocation5 + $0x250] sm:$0xff]
    %v181 = vld [vmem:[#allocation5 + $0x258] sm:$0xff]
    %v182 = vld [vmem:[#allocation5 + $0x260] sm:$0xff]
    %v183 = vld [vmem:[#allocation5 + $0x268] sm:$0xff]
    %v184 = vld [vmem:[#allocation5 + $0x270] sm:$0xff]
    %v185 = vld [vmem:[#allocation5 + $0x278] sm:$0xff]
    %v186 = vld [vmem:[#allocation5 + $0x280] sm:$0xff]
    %v187 = vld [vmem:[#allocation5 + $0x288] sm:$0xff]
    %v188 = vld [vmem:[#allocation5 + $0x290] sm:$0xff]
    %v189 = vld [vmem:[#allocation5 + $0x298] sm:$0xff]
    %v190 = vld [vmem:[#allocation5 + $0x2a0] sm:$0xff]
    %v191 = vld [vmem:[#allocation5 + $0x2a8] sm:$0xff]
    %v192 = vld [vmem:[#allocation5 + $0x2b0] sm:$0xff]
    %v193 = vld [vmem:[#allocation5 + $0x2b8] sm:$0xff]
    %v194 = vld [vmem:[#allocation5 + $0x2c0] sm:$0xff]
    %v195 = vld [vmem:[#allocation5 + $0x2c8] sm:$0xff]
    %v196 = vld [vmem:[#allocation5 + $0x2d0] sm:$0xff]
    %v197 = vld [vmem:[#allocation5 + $0x2d8] sm:$0xff]
    %v198 = vld [vmem:[#allocation5 + $0x2e0] sm:$0xff]
    %v199 = vld [vmem:[#allocation5 + $0x2e8] sm:$0xff]
    %v200 = vld [vmem:[#allocation5 + $0x2f0] sm:$0xff]
    %v201 = vld [vmem:[#allocation5 + $0x2f8] sm:$0xff]
    %v202 = vld [vmem:[#allocation5 + $0x300] sm:$0xff]
    %v203 = vld [vmem:[#allocation5 + $0x308] sm:$0xff]
    %v204 = vld [vmem:[#allocation5 + $0x310] sm:$0xff]
    %v205 = vld [vmem:[#allocation5 + $0x318] sm:$0xff]
    %v206 = vld [vmem:[#allocation5 + $0x320] sm:$0xff]
    %v207 = vld [vmem:[#allocation5 + $0x328] sm:$0xff]
    %v208 = vld [vmem:[#allocation5 + $0x330] sm:$0xff]
    %v209 = vld [vmem:[#allocation5 + $0x338] sm:$0xff]
    %v210 = vld [vmem:[#allocation5 + $0x340] sm:$0xff]
    %v211 = vld [vmem:[#allocation5 + $0x348] sm:$0xff]
    %v212 = vld [vmem:[#allocation5 + $0x350] sm:$0xff]
    %v213 = vld [vmem:[#allocation5 + $0x358] sm:$0xff]
    %v214 = vld [vmem:[#allocation5 + $0x360] sm:$0xff]
    %v215 = vld [vmem:[#allocation5 + $0x368] sm:$0xff]
    %v216 = vld [vmem:[#allocation5 + $0x370] sm:$0xff]
    %v217 = vld [vmem:[#allocation5 + $0x378] sm:$0xff]
    %v218 = vld [vmem:[#allocation5 + $0x380] sm:$0xff]
    %v219 = vld [vmem:[#allocation5 + $0x388] sm:$0xff]
    %v220 = vld [vmem:[#allocation5 + $0x390] sm:$0xff]
    %v221 = vld [vmem:[#allocation5 + $0x398] sm:$0xff]
    %v222 = vld [vmem:[#allocation5 + $0x3a0] sm:$0xff]
    %v223 = vld [vmem:[#allocation5 + $0x3a8] sm:$0xff]
    %v224 = vld [vmem:[#allocation5 + $0x3b0] sm:$0xff]
    %v225 = vld [vmem:[#allocation5 + $0x3b8] sm:$0xff]
    %v226 = vld [vmem:[#allocation5 + $0x3c0] sm:$0xff]
    %v227 = vld [vmem:[#allocation5 + $0x3c8] sm:$0xff]
    %v228 = vld [vmem:[#allocation5 + $0x3d0] sm:$0xff]
    %v229 = vld [vmem:[#allocation5 + $0x3d8] sm:$0xff]
    %v230 = vld [vmem:[#allocation5 + $0x3e0] sm:$0xff]
    %v231 = vld [vmem:[#allocation5 + $0x3e8] sm:$0xff]
    %v232 = vld [vmem:[#allocation5 + $0x3f0] sm:$0xff]
    %v233 = vld [vmem:[#allocation5 + $0x3f8] sm:$0xff]
    %v234 = vld [vmem:[#allocation5 + $0x400] sm:$0xff]
    %v235 = vld [vmem:[#allocation5 + $0x408] sm:$0xff]
    %v236 = vld [vmem:[#allocation5 + $0x410] sm:$0xff]
    %v237 = vld [vmem:[#allocation5 + $0x418] sm:$0xff]
    %v238 = vld [vmem:[#allocation5 + $0x420] sm:$0xff]
    %v239 = vld [vmem:[#allocation5 + $0x428] sm:$0xff]
    %v240 = vld [vmem:[#allocation5 + $0x430] sm:$0xff]
    %v241 = vld [vmem:[#allocation5 + $0x438] sm:$0xff]
    %v242 = vld [vmem:[#allocation5 + $0x440] sm:$0xff]
    %v243 = vld [vmem:[#allocation5 + $0x448] sm:$0xff]
    %v244 = vld [vmem:[#allocation5 + $0x450] sm:$0xff]
    %v245 = vld [vmem:[#allocation5 + $0x458] sm:$0xff]
    %v246 = vld [vmem:[#allocation5 + $0x460] sm:$0xff]
    %v247 = vld [vmem:[#allocation5 + $0x468] sm:$0xff]
    %v248 = vld [vmem:[#allocation5 + $0x470] sm:$0xff]
    %v249 = vld [vmem:[#allocation5 + $0x478] sm:$0xff]
    %v250 = vld [vmem:[#allocation5 + $0x480] sm:$0xff]
    %v251 = vld [vmem:[#allocation5 + $0x488] sm:$0xff]
    %v252 = vld [vmem:[#allocation5 + $0x490] sm:$0xff]
    %v253 = vld [vmem:[#allocation5 + $0x498] sm:$0xff]
    %v254 = vld [vmem:[#allocation5 + $0x4a0] sm:$0xff]
    %v255 = vld [vmem:[#allocation5 + $0x4a8] sm:$0xff]
    %v256 = vld [vmem:[#allocation5 + $0x4b0] sm:$0xff]
    %v257 = vld [vmem:[#allocation5 + $0x4b8] sm:$0xff]
    %v258 = vld [vmem:[#allocation5 + $0x4c0] sm:$0xff]
    %v259 = vld [vmem:[#allocation5 + $0x4c8] sm:$0xff]
    %v260 = vld [vmem:[#allocation5 + $0x4d0] sm:$0xff]
    %v261 = vld [vmem:[#allocation5 + $0x4d8] sm:$0xff]
    %v262 = vld [vmem:[#allocation5 + $0x4e0] sm:$0xff]
    %v263 = vld [vmem:[#allocation5 + $0x4e8] sm:$0xff]
    %v264 = vld [vmem:[#allocation5 + $0x4f0] sm:$0xff]
    %v265 = vld [vmem:[#allocation5 + $0x4f8] sm:$0xff]
    %v266 = vld [vmem:[#allocation5 + $0x500] sm:$0xff]
    %v267 = vld [vmem:[#allocation5 + $0x508] sm:$0xff]
    %v268 = vld [vmem:[#allocation5 + $0x510] sm:$0xff]
    %v269 = vld [vmem:[#allocation5 + $0x518] sm:$0xff]
    %v270 = vld [vmem:[#allocation5 + $0x520] sm:$0xff]
    %v271 = vld [vmem:[#allocation5 + $0x528] sm:$0xff]
    %v272 = vld [vmem:[#allocation5 + $0x530] sm:$0xff]
    %v273 = vld [vmem:[#allocation5 + $0x538] sm:$0xff]
    %v274 = vld [vmem:[#allocation5 + $0x540] sm:$0xff]
    %v275 = vld [vmem:[#allocation5 + $0x548] sm:$0xff]
    %v276 = vld [vmem:[#allocation5 + $0x550] sm:$0xff]
    %v277 = vld [vmem:[#allocation5 + $0x558] sm:$0xff]
    %v278 = vld [vmem:[#allocation5 + $0x560] sm:$0xff]
    %v279 = vld [vmem:[#allocation5 + $0x568] sm:$0xff]
    %v280 = vld [vmem:[#allocation5 + $0x570] sm:$0xff]
    %v281 = vld [vmem:[#allocation5 + $0x578] sm:$0xff]
    %v282 = vld [vmem:[#allocation5 + $0x580] sm:$0xff]
    %v283 = vld [vmem:[#allocation5 + $0x588] sm:$0xff]
    %v284 = vld [vmem:[#allocation5 + $0x590] sm:$0xff]
    %v285 = vld [vmem:[#allocation5 + $0x598] sm:$0xff]
    %v286 = vld [vmem:[#allocation5 + $0x5a0] sm:$0xff]
    %v287 = vld [vmem:[#allocation5 + $0x5a8] sm:$0xff]
    %v288 = vld [vmem:[#allocation5 + $0x5b0] sm:$0xff]
    %v289 = vld [vmem:[#allocation5 + $0x5b8] sm:$0xff]
    %v290 = vld [vmem:[#allocation5 + $0x5c0] sm:$0xff]
    %v291 = vld [vmem:[#allocation5 + $0x5c8] sm:$0xff]
    %v292 = vld [vmem:[#allocation5 + $0x5d0] sm:$0xff]
    %v293 = vld [vmem:[#allocation5 + $0x5d8] sm:$0xff]
    %v294 = vld [vmem:[#allocation5 + $0x5e0] sm:$0xff]
    %v295 = vld [vmem:[#allocation5 + $0x5e8] sm:$0xff]
    %v296 = vld [vmem:[#allocation5 + $0x5f0] sm:$0xff]
    %v297 = vld [vmem:[#allocation5 + $0x5f8] sm:$0xff]
    %v298 = vld [vmem:[#allocation5 + $0x600] sm:$0xff]
    %v299 = vld [vmem:[#allocation5 + $0x608] sm:$0xff]
    %v300 = vld [vmem:[#allocation5 + $0x610] sm:$0xff]
    %v301 = vld [vmem:[#allocation5 + $0x618] sm:$0xff]
    %v302 = vld [vmem:[#allocation7] sm:$0xf]
    %v304 = vlaneseq
    %v305 = vshrl.u32 %v304, 7
    %v306 = vsub.s32 0, %v305
    %v307 = vrot.slane %v302, %v306
    %v308 = vlaneseq
    %v309 = vshrl.u32 %v308, 7
    %v310 = vsub.s32 1, %v309
    %v311 = vrot.slane %v302, %v310
    %v312 = vlaneseq
    %v313 = vshrl.u32 %v312, 7
    %v314 = vsub.s32 2, %v313
    %v315 = vrot.slane %v302, %v314
    %v316 = vlaneseq
    %v317 = vshrl.u32 %v316, 7
    %v318 = vsub.s32 3, %v317
    %v319 = vrot.slane %v302, %v318
    %v520 = vunpack.c.l.b16 %v106
    %v521 = vunpack.c.h.b16 %v106
    %v522 = vunpack.c.l.b16 %v107
    %v523 = vunpack.c.h.b16 %v107
    %v524 = vunpack.c.l.b16 %v108
    %v525 = vunpack.c.h.b16 %v108
    %v526 = vunpack.c.l.b16 %v109
    %v527 = vunpack.c.h.b16 %v109
    %v528 = vunpack.c.l.b16 %v110
    %v529 = vunpack.c.h.b16 %v110
    %v530 = vunpack.c.l.b16 %v111
    %v531 = vunpack.c.h.b16 %v111
    %v532 = vunpack.c.l.b16 %v112
    %v533 = vunpack.c.h.b16 %v112
    %v534 = vunpack.c.l.b16 %v113
    %v535 = vunpack.c.h.b16 %v113
    %v536 = vunpack.c.l.b16 %v114
    %v537 = vunpack.c.h.b16 %v114
    %v538 = vunpack.c.l.b16 %v115
    %v539 = vunpack.c.h.b16 %v115
    %v540 = vunpack.c.l.b16 %v116
    %v541 = vunpack.c.h.b16 %v116
    %v542 = vunpack.c.l.b16 %v117
    %v543 = vunpack.c.h.b16 %v117
    %v544 = vunpack.c.l.b16 %v118
    %v545 = vunpack.c.h.b16 %v118
    %v546 = vunpack.c.l.b16 %v119
    %v547 = vunpack.c.h.b16 %v119
    %v548 = vunpack.c.l.b16 %v120
    %v549 = vunpack.c.h.b16 %v120
    %v550 = vunpack.c.l.b16 %v121
    %v551 = vunpack.c.h.b16 %v121
    %v552 = vunpack.c.l.b16 %v122
    %v553 = vunpack.c.h.b16 %v122
    %v554 = vunpack.c.l.b16 %v123
    %v555 = vunpack.c.h.b16 %v123
    %v556 = vunpack.c.l.b16 %v124
    %v557 = vunpack.c.h.b16 %v124
    %v558 = vunpack.c.l.b16 %v125
    %v559 = vunpack.c.h.b16 %v125
    %v560 = vunpack.c.l.b16 %v126
    %v561 = vunpack.c.h.b16 %v126
    %v562 = vunpack.c.l.b16 %v127
    %v563 = vunpack.c.h.b16 %v127
    %v564 = vunpack.c.l.b16 %v128
    %v565 = vunpack.c.h.b16 %v128
    %v566 = vunpack.c.l.b16 %v129
    %v567 = vunpack.c.h.b16 %v129
    %v568 = vunpack.c.l.b16 %v130
    %v569 = vunpack.c.h.b16 %v130
    %v570 = vunpack.c.l.b16 %v131
    %v571 = vunpack.c.h.b16 %v131
    %v572 = vunpack.c.l.b16 %v132
    %v573 = vunpack.c.h.b16 %v132
    %v574 = vunpack.c.l.b16 %v133
    %v575 = vunpack.c.h.b16 %v133
    %v576 = vunpack.c.l.b16 %v134
    %v577 = vunpack.c.h.b16 %v134
    %v578 = vunpack.c.l.b16 %v135
    %v579 = vunpack.c.h.b16 %v135
    %v580 = vunpack.c.l.b16 %v136
    %v581 = vunpack.c.h.b16 %v136
    %v582 = vunpack.c.l.b16 %v137
    %v583 = vunpack.c.h.b16 %v137
    %v584 = vunpack.c.l.b16 %v138
    %v585 = vunpack.c.h.b16 %v138
    %v586 = vunpack.c.l.b16 %v139
    %v587 = vunpack.c.h.b16 %v139
    %v588 = vunpack.c.l.b16 %v140
    %v589 = vunpack.c.h.b16 %v140
    %v590 = vunpack.c.l.b16 %v141
    %v591 = vunpack.c.h.b16 %v141
    %v592 = vunpack.c.l.b16 %v142
    %v593 = vunpack.c.h.b16 %v142
    %v594 = vunpack.c.l.b16 %v143
    %v595 = vunpack.c.h.b16 %v143
    %v596 = vunpack.c.l.b16 %v144
    %v597 = vunpack.c.h.b16 %v144
    %v598 = vunpack.c.l.b16 %v145
    %v599 = vunpack.c.h.b16 %v145
    %v600 = vunpack.c.l.b16 %v146
    %v601 = vunpack.c.h.b16 %v146
    %v602 = vunpack.c.l.b16 %v147
    %v603 = vunpack.c.h.b16 %v147
    %v604 = vunpack.c.l.b16 %v148
    %v605 = vunpack.c.h.b16 %v148
    %v606 = vunpack.c.l.b16 %v149
    %v607 = vunpack.c.h.b16 %v149
    %v608 = vunpack.c.l.b16 %v150
    %v609 = vunpack.c.h.b16 %v150
    %v610 = vunpack.c.l.b16 %v151
    %v611 = vunpack.c.h.b16 %v151
    %v612 = vunpack.c.l.b16 %v152
    %v613 = vunpack.c.h.b16 %v152
    %v614 = vunpack.c.l.b16 %v153
    %v615 = vunpack.c.h.b16 %v153
    %v616 = vunpack.c.l.b16 %v154
    %v617 = vunpack.c.h.b16 %v154
    %v618 = vunpack.c.l.b16 %v155
    %v619 = vunpack.c.h.b16 %v155
    %v620 = vunpack.c.l.b16 %v156
    %v621 = vunpack.c.h.b16 %v156
    %v622 = vunpack.c.l.b16 %v157
    %v623 = vunpack.c.h.b16 %v157
    %v624 = vunpack.c.l.b16 %v158
    %v625 = vunpack.c.h.b16 %v158
    %v626 = vunpack.c.l.b16 %v159
    %v627 = vunpack.c.h.b16 %v159
    %v628 = vunpack.c.l.b16 %v160
    %v629 = vunpack.c.h.b16 %v160
    %v630 = vunpack.c.l.b16 %v161
    %v631 = vunpack.c.h.b16 %v161
    %v632 = vunpack.c.l.b16 %v162
    %v633 = vunpack.c.h.b16 %v162
    %v634 = vunpack.c.l.b16 %v163
    %v635 = vunpack.c.h.b16 %v163
    %v636 = vunpack.c.l.b16 %v164
    %v637 = vunpack.c.h.b16 %v164
    %v638 = vunpack.c.l.b16 %v165
    %v639 = vunpack.c.h.b16 %v165
    %v640 = vunpack.c.l.b16 %v166
    %v641 = vunpack.c.h.b16 %v166
    %v642 = vunpack.c.l.b16 %v167
    %v643 = vunpack.c.h.b16 %v167
    %v644 = vunpack.c.l.b16 %v168
    %v645 = vunpack.c.h.b16 %v168
    %v646 = vunpack.c.l.b16 %v169
    %v647 = vunpack.c.h.b16 %v169
    %v648 = vunpack.c.l.b16 %v170
    %v649 = vunpack.c.h.b16 %v170
    %v650 = vunpack.c.l.b16 %v171
    %v651 = vunpack.c.h.b16 %v171
    %v652 = vunpack.c.l.b16 %v172
    %v653 = vunpack.c.h.b16 %v172
    %v654 = vunpack.c.l.b16 %v173
    %v655 = vunpack.c.h.b16 %v173
    %v656 = vunpack.c.l.b16 %v174
    %v657 = vunpack.c.h.b16 %v174
    %v658 = vunpack.c.l.b16 %v175
    %v659 = vunpack.c.h.b16 %v175
    %v660 = vunpack.c.l.b16 %v176
    %v661 = vunpack.c.h.b16 %v176
    %v662 = vunpack.c.l.b16 %v177
    %v663 = vunpack.c.h.b16 %v177
    %v664 = vunpack.c.l.b16 %v178
    %v665 = vunpack.c.h.b16 %v178
    %v666 = vunpack.c.l.b16 %v179
    %v667 = vunpack.c.h.b16 %v179
    %v668 = vunpack.c.l.b16 %v180
    %v669 = vunpack.c.h.b16 %v180
    %v670 = vunpack.c.l.b16 %v181
    %v671 = vunpack.c.h.b16 %v181
    %v672 = vunpack.c.l.b16 %v182
    %v673 = vunpack.c.h.b16 %v182
    %v674 = vunpack.c.l.b16 %v183
    %v675 = vunpack.c.h.b16 %v183
    %v676 = vunpack.c.l.b16 %v184
    %v677 = vunpack.c.h.b16 %v184
    %v678 = vunpack.c.l.b16 %v185
    %v679 = vunpack.c.h.b16 %v185
    %v680 = vunpack.c.l.b16 %v186
    %v681 = vunpack.c.h.b16 %v186
    %v682 = vunpack.c.l.b16 %v187
    %v683 = vunpack.c.h.b16 %v187
    %v684 = vunpack.c.l.b16 %v188
    %v685 = vunpack.c.h.b16 %v188
    %v686 = vunpack.c.l.b16 %v189
    %v687 = vunpack.c.h.b16 %v189
    %v688 = vunpack.c.l.b16 %v190
    %v689 = vunpack.c.h.b16 %v190
    %v690 = vunpack.c.l.b16 %v191
    %v691 = vunpack.c.h.b16 %v191
    %v692 = vunpack.c.l.b16 %v192
    %v693 = vunpack.c.h.b16 %v192
    %v694 = vunpack.c.l.b16 %v193
    %v695 = vunpack.c.h.b16 %v193
    %v696 = vunpack.c.l.b16 %v194
    %v697 = vunpack.c.h.b16 %v194
    %v698 = vunpack.c.l.b16 %v195
    %v699 = vunpack.c.h.b16 %v195
    %v700 = vunpack.c.l.b16 %v196
    %v701 = vunpack.c.h.b16 %v196
    %v702 = vunpack.c.l.b16 %v197
    %v703 = vunpack.c.h.b16 %v197
    %v704 = vunpack.c.l.b16 %v198
    %v705 = vunpack.c.h.b16 %v198
    %v706 = vunpack.c.l.b16 %v199
    %v707 = vunpack.c.h.b16 %v199
    %v708 = vunpack.c.l.b16 %v200
    %v709 = vunpack.c.h.b16 %v200
    %v710 = vunpack.c.l.b16 %v201
    %v711 = vunpack.c.h.b16 %v201
    %v712 = vunpack.c.l.b16 %v202
    %v713 = vunpack.c.h.b16 %v202
    %v714 = vunpack.c.l.b16 %v203
    %v715 = vunpack.c.h.b16 %v203
    %v716 = vunpack.c.l.b16 %v204
    %v717 = vunpack.c.h.b16 %v204
    %v718 = vunpack.c.l.b16 %v205
    %v719 = vunpack.c.h.b16 %v205
    %v720 = vunpack.c.l.b16 %v206
    %v721 = vunpack.c.h.b16 %v206
    %v722 = vunpack.c.l.b16 %v207
    %v723 = vunpack.c.h.b16 %v207
    %v724 = vunpack.c.l.b16 %v208
    %v725 = vunpack.c.h.b16 %v208
    %v726 = vunpack.c.l.b16 %v209
    %v727 = vunpack.c.h.b16 %v209
    %v728 = vunpack.c.l.b16 %v210
    %v729 = vunpack.c.h.b16 %v210
    %v730 = vunpack.c.l.b16 %v211
    %v731 = vunpack.c.h.b16 %v211
    %v732 = vunpack.c.l.b16 %v212
    %v733 = vunpack.c.h.b16 %v212
    %v734 = vunpack.c.l.b16 %v213
    %v735 = vunpack.c.h.b16 %v213
    %v736 = vunpack.c.l.b16 %v214
    %v737 = vunpack.c.h.b16 %v214
    %v738 = vunpack.c.l.b16 %v215
    %v739 = vunpack.c.h.b16 %v215
    %v740 = vunpack.c.l.b16 %v216
    %v741 = vunpack.c.h.b16 %v216
    %v742 = vunpack.c.l.b16 %v217
    %v743 = vunpack.c.h.b16 %v217
    %v744 = vunpack.c.l.b16 %v218
    %v745 = vunpack.c.h.b16 %v218
    %v746 = vunpack.c.l.b16 %v219
    %v747 = vunpack.c.h.b16 %v219
    %v748 = vunpack.c.l.b16 %v220
    %v749 = vunpack.c.h.b16 %v220
    %v750 = vunpack.c.l.b16 %v221
    %v751 = vunpack.c.h.b16 %v221
    %v752 = vunpack.c.l.b16 %v222
    %v753 = vunpack.c.h.b16 %v222
    %v754 = vunpack.c.l.b16 %v223
    %v755 = vunpack.c.h.b16 %v223
    %v756 = vunpack.c.l.b16 %v224
    %v757 = vunpack.c.h.b16 %v224
    %v758 = vunpack.c.l.b16 %v225
    %v759 = vunpack.c.h.b16 %v225
    %v760 = vunpack.c.l.b16 %v226
    %v761 = vunpack.c.h.b16 %v226
    %v762 = vunpack.c.l.b16 %v227
    %v763 = vunpack.c.h.b16 %v227
    %v764 = vunpack.c.l.b16 %v228
    %v765 = vunpack.c.h.b16 %v228
    %v766 = vunpack.c.l.b16 %v229
    %v767 = vunpack.c.h.b16 %v229
    %v768 = vunpack.c.l.b16 %v230
    %v769 = vunpack.c.h.b16 %v230
    %v770 = vunpack.c.l.b16 %v231
    %v771 = vunpack.c.h.b16 %v231
    %v772 = vunpack.c.l.b16 %v232
    %v773 = vunpack.c.h.b16 %v232
    %v774 = vunpack.c.l.b16 %v233
    %v775 = vunpack.c.h.b16 %v233
    %v776 = vunpack.c.l.b16 %v234
    %v777 = vunpack.c.h.b16 %v234
    %v778 = vunpack.c.l.b16 %v235
    %v779 = vunpack.c.h.b16 %v235
    %v780 = vunpack.c.l.b16 %v236
    %v781 = vunpack.c.h.b16 %v236
    %v782 = vunpack.c.l.b16 %v237
    %v783 = vunpack.c.h.b16 %v237
    %v784 = vunpack.c.l.b16 %v238
    %v785 = vunpack.c.h.b16 %v238
    %v786 = vunpack.c.l.b16 %v239
    %v787 = vunpack.c.h.b16 %v239
    %v788 = vunpack.c.l.b16 %v240
    %v789 = vunpack.c.h.b16 %v240
    %v790 = vunpack.c.l.b16 %v241
    %v791 = vunpack.c.h.b16 %v241
    %v792 = vunpack.c.l.b16 %v242
    %v793 = vunpack.c.h.b16 %v242
    %v794 = vunpack.c.l.b16 %v243
    %v795 = vunpack.c.h.b16 %v243
    %v796 = vunpack.c.l.b16 %v244
    %v797 = vunpack.c.h.b16 %v244
    %v798 = vunpack.c.l.b16 %v245
    %v799 = vunpack.c.h.b16 %v245
    %v800 = vunpack.c.l.b16 %v246
    %v801 = vunpack.c.h.b16 %v246
    %v802 = vunpack.c.l.b16 %v247
    %v803 = vunpack.c.h.b16 %v247
    %v804 = vunpack.c.l.b16 %v248
    %v805 = vunpack.c.h.b16 %v248
    %v806 = vunpack.c.l.b16 %v249
    %v807 = vunpack.c.h.b16 %v249
    %v808 = vunpack.c.l.b16 %v250
    %v809 = vunpack.c.h.b16 %v250
    %v810 = vunpack.c.l.b16 %v251
    %v811 = vunpack.c.h.b16 %v251
    %v812 = vunpack.c.l.b16 %v252
    %v813 = vunpack.c.h.b16 %v252
    %v814 = vunpack.c.l.b16 %v253
    %v815 = vunpack.c.h.b16 %v253
    %v816 = vunpack.c.l.b16 %v254
    %v817 = vunpack.c.h.b16 %v254
    %v818 = vunpack.c.l.b16 %v255
    %v819 = vunpack.c.h.b16 %v255
    %v820 = vunpack.c.l.b16 %v256
    %v821 = vunpack.c.h.b16 %v256
    %v822 = vunpack.c.l.b16 %v257
    %v823 = vunpack.c.h.b16 %v257
    %v824 = vunpack.c.l.b16 %v258
    %v825 = vunpack.c.h.b16 %v258
    %v826 = vunpack.c.l.b16 %v259
    %v827 = vunpack.c.h.b16 %v259
    %v828 = vunpack.c.l.b16 %v260
    %v829 = vunpack.c.h.b16 %v260
    %v830 = vunpack.c.l.b16 %v261
    %v831 = vunpack.c.h.b16 %v261
    %v832 = vunpack.c.l.b16 %v262
    %v833 = vunpack.c.h.b16 %v262
    %v834 = vunpack.c.l.b16 %v263
    %v835 = vunpack.c.h.b16 %v263
    %v836 = vunpack.c.l.b16 %v264
    %v837 = vunpack.c.h.b16 %v264
    %v838 = vunpack.c.l.b16 %v265
    %v839 = vunpack.c.h.b16 %v265
    %v840 = vunpack.c.l.b16 %v266
    %v841 = vunpack.c.h.b16 %v266
    %v842 = vunpack.c.l.b16 %v267
    %v843 = vunpack.c.h.b16 %v267
    %v844 = vunpack.c.l.b16 %v268
    %v845 = vunpack.c.h.b16 %v268
    %v846 = vunpack.c.l.b16 %v269
    %v847 = vunpack.c.h.b16 %v269
    %v848 = vunpack.c.l.b16 %v270
    %v849 = vunpack.c.h.b16 %v270
    %v850 = vunpack.c.l.b16 %v271
    %v851 = vunpack.c.h.b16 %v271
    %v852 = vunpack.c.l.b16 %v272
    %v853 = vunpack.c.h.b16 %v272
    %v854 = vunpack.c.l.b16 %v273
    %v855 = vunpack.c.h.b16 %v273
    %v856 = vunpack.c.l.b16 %v274
    %v857 = vunpack.c.h.b16 %v274
    %v858 = vunpack.c.l.b16 %v275
    %v859 = vunpack.c.h.b16 %v275
    %v860 = vunpack.c.l.b16 %v276
    %v861 = vunpack.c.h.b16 %v276
    %v862 = vunpack.c.l.b16 %v277
    %v863 = vunpack.c.h.b16 %v277
    %v864 = vunpack.c.l.b16 %v278
    %v865 = vunpack.c.h.b16 %v278
    %v866 = vunpack.c.l.b16 %v279
    %v867 = vunpack.c.h.b16 %v279
    %v868 = vunpack.c.l.b16 %v280
    %v869 = vunpack.c.h.b16 %v280
    %v870 = vunpack.c.l.b16 %v281
    %v871 = vunpack.c.h.b16 %v281
    %v872 = vunpack.c.l.b16 %v282
    %v873 = vunpack.c.h.b16 %v282
    %v874 = vunpack.c.l.b16 %v283
    %v875 = vunpack.c.h.b16 %v283
    %v876 = vunpack.c.l.b16 %v284
    %v877 = vunpack.c.h.b16 %v284
    %v878 = vunpack.c.l.b16 %v285
    %v879 = vunpack.c.h.b16 %v285
    %v880 = vunpack.c.l.b16 %v286
    %v881 = vunpack.c.h.b16 %v286
    %v882 = vunpack.c.l.b16 %v287
    %v883 = vunpack.c.h.b16 %v287
    %v884 = vunpack.c.l.b16 %v288
    %v885 = vunpack.c.h.b16 %v288
    %v886 = vunpack.c.l.b16 %v289
    %v887 = vunpack.c.h.b16 %v289
    %v888 = vunpack.c.l.b16 %v290
    %v889 = vunpack.c.h.b16 %v290
    %v890 = vunpack.c.l.b16 %v291
    %v891 = vunpack.c.h.b16 %v291
    %v892 = vunpack.c.l.b16 %v292
    %v893 = vunpack.c.h.b16 %v292
    %v894 = vunpack.c.l.b16 %v293
    %v895 = vunpack.c.h.b16 %v293
    %v896 = vunpack.c.l.b16 %v294
    %v897 = vunpack.c.h.b16 %v294
    %v898 = vunpack.c.l.b16 %v295
    %v899 = vunpack.c.h.b16 %v295
    %v900 = vunpack.c.l.b16 %v296
    %v901 = vunpack.c.h.b16 %v296
    %v902 = vunpack.c.l.b16 %v297
    %v903 = vunpack.c.h.b16 %v297
    %v904 = vunpack.c.l.b16 %v298
    %v905 = vunpack.c.h.b16 %v298
    %v906 = vunpack.c.l.b16 %v299
    %v907 = vunpack.c.h.b16 %v299
    %v908 = vunpack.c.l.b16 %v300
    %v909 = vunpack.c.h.b16 %v300
    %v910 = vunpack.c.l.b16 %v301
    %v911 = vunpack.c.h.b16 %v301
    %v912 = vpack.c.b16 %v524, %v520
    %v913 = vpack.c.b16 %v525, %v521
    %v914 = vpack.c.b16 %v526, %v522
    %v915 = vpack.c.b16 %v527, %v523
    %v916 = vpack.c.b16 %v532, %v528
    %v917 = vpack.c.b16 %v533, %v529
    %v918 = vpack.c.b16 %v534, %v530
    %v919 = vpack.c.b16 %v535, %v531
    %v920 = vpack.c.b16 %v540, %v536
    %v921 = vpack.c.b16 %v541, %v537
    %v922 = vpack.c.b16 %v542, %v538
    %v923 = vpack.c.b16 %v543, %v539
    %v924 = vpack.c.b16 %v548, %v544
    %v925 = vpack.c.b16 %v549, %v545
    %v926 = vpack.c.b16 %v550, %v546
    %v927 = vpack.c.b16 %v551, %v547
    %v928 = vpack.c.b16 %v556, %v552
    %v929 = vpack.c.b16 %v557, %v553
    %v930 = vpack.c.b16 %v558, %v554
    %v931 = vpack.c.b16 %v559, %v555
    %v932 = vpack.c.b16 %v564, %v560
    %v933 = vpack.c.b16 %v565, %v561
    %v934 = vpack.c.b16 %v566, %v562
    %v935 = vpack.c.b16 %v567, %v563
    %v936 = vpack.c.b16 %v572, %v568
    %v937 = vpack.c.b16 %v573, %v569
    %v938 = vpack.c.b16 %v574, %v570
    %v939 = vpack.c.b16 %v575, %v571
    %v940 = vpack.c.b16 %v580, %v576
    %v941 = vpack.c.b16 %v581, %v577
    %v942 = vpack.c.b16 %v582, %v578
    %v943 = vpack.c.b16 %v583, %v579
    %v944 = vpack.c.b16 %v588, %v584
    %v945 = vpack.c.b16 %v589, %v585
    %v946 = vpack.c.b16 %v590, %v586
    %v947 = vpack.c.b16 %v591, %v587
    %v948 = vpack.c.b16 %v596, %v592
    %v949 = vpack.c.b16 %v597, %v593
    %v950 = vpack.c.b16 %v598, %v594
    %v951 = vpack.c.b16 %v599, %v595
    %v952 = vpack.c.b16 %v604, %v600
    %v953 = vpack.c.b16 %v605, %v601
    %v954 = vpack.c.b16 %v606, %v602
    %v955 = vpack.c.b16 %v607, %v603
    %v956 = vpack.c.b16 %v612, %v608
    %v957 = vpack.c.b16 %v613, %v609
    %v958 = vpack.c.b16 %v614, %v610
    %v959 = vpack.c.b16 %v615, %v611
    %v960 = vpack.c.b16 %v620, %v616
    %v961 = vpack.c.b16 %v621, %v617
    %v962 = vpack.c.b16 %v622, %v618
    %v963 = vpack.c.b16 %v623, %v619
    %v964 = vpack.c.b16 %v628, %v624
    %v965 = vpack.c.b16 %v629, %v625
    %v966 = vpack.c.b16 %v630, %v626
    %v967 = vpack.c.b16 %v631, %v627
    %v968 = vpack.c.b16 %v636, %v632
    %v969 = vpack.c.b16 %v637, %v633
    %v970 = vpack.c.b16 %v638, %v634
    %v971 = vpack.c.b16 %v639, %v635
    %v972 = vpack.c.b16 %v644, %v640
    %v973 = vpack.c.b16 %v645, %v641
    %v974 = vpack.c.b16 %v646, %v642
    %v975 = vpack.c.b16 %v647, %v643
    %v976 = vpack.c.b16 %v652, %v648
    %v977 = vpack.c.b16 %v653, %v649
    %v978 = vpack.c.b16 %v654, %v650
    %v979 = vpack.c.b16 %v655, %v651
    %v980 = vpack.c.b16 %v660, %v656
    %v981 = vpack.c.b16 %v661, %v657
    %v982 = vpack.c.b16 %v662, %v658
    %v983 = vpack.c.b16 %v663, %v659
    %v984 = vpack.c.b16 %v668, %v664
    %v985 = vpack.c.b16 %v669, %v665
    %v986 = vpack.c.b16 %v670, %v666
    %v987 = vpack.c.b16 %v671, %v667
    %v988 = vpack.c.b16 %v676, %v672
    %v989 = vpack.c.b16 %v677, %v673
    %v990 = vpack.c.b16 %v678, %v674
    %v991 = vpack.c.b16 %v679, %v675
    %v992 = vpack.c.b16 %v684, %v680
    %v993 = vpack.c.b16 %v685, %v681
    %v994 = vpack.c.b16 %v686, %v682
    %v995 = vpack.c.b16 %v687, %v683
    %v996 = vpack.c.b16 %v692, %v688
    %v997 = vpack.c.b16 %v693, %v689
    %v998 = vpack.c.b16 %v694, %v690
    %v999 = vpack.c.b16 %v695, %v691
    %v1000 = vpack.c.b16 %v700, %v696
    %v1001 = vpack.c.b16 %v701, %v697
    %v1002 = vpack.c.b16 %v702, %v698
    %v1003 = vpack.c.b16 %v703, %v699
    %v1004 = vpack.c.b16 %v708, %v704
    %v1005 = vpack.c.b16 %v709, %v705
    %v1006 = vpack.c.b16 %v710, %v706
    %v1007 = vpack.c.b16 %v711, %v707
    %v1008 = vpack.c.b16 %v716, %v712
    %v1009 = vpack.c.b16 %v717, %v713
    %v1010 = vpack.c.b16 %v718, %v714
    %v1011 = vpack.c.b16 %v719, %v715
    %v1012 = vpack.c.b16 %v724, %v720
    %v1013 = vpack.c.b16 %v725, %v721
    %v1014 = vpack.c.b16 %v726, %v722
    %v1015 = vpack.c.b16 %v727, %v723
    %v1016 = vpack.c.b16 %v732, %v728
    %v1017 = vpack.c.b16 %v733, %v729
    %v1018 = vpack.c.b16 %v734, %v730
    %v1019 = vpack.c.b16 %v735, %v731
    %v1020 = vpack.c.b16 %v740, %v736
    %v1021 = vpack.c.b16 %v741, %v737
    %v1022 = vpack.c.b16 %v742, %v738
    %v1023 = vpack.c.b16 %v743, %v739
    %v1024 = vpack.c.b16 %v748, %v744
    %v1025 = vpack.c.b16 %v749, %v745
    %v1026 = vpack.c.b16 %v750, %v746
    %v1027 = vpack.c.b16 %v751, %v747
    %v1028 = vpack.c.b16 %v756, %v752
    %v1029 = vpack.c.b16 %v757, %v753
    %v1030 = vpack.c.b16 %v758, %v754
    %v1031 = vpack.c.b16 %v759, %v755
    %v1032 = vpack.c.b16 %v764, %v760
    %v1033 = vpack.c.b16 %v765, %v761
    %v1034 = vpack.c.b16 %v766, %v762
    %v1035 = vpack.c.b16 %v767, %v763
    %v1036 = vpack.c.b16 %v772, %v768
    %v1037 = vpack.c.b16 %v773, %v769
    %v1038 = vpack.c.b16 %v774, %v770
    %v1039 = vpack.c.b16 %v775, %v771
    %v1040 = vpack.c.b16 %v780, %v776
    %v1041 = vpack.c.b16 %v781, %v777
    %v1042 = vpack.c.b16 %v782, %v778
    %v1043 = vpack.c.b16 %v783, %v779
    %v1044 = vpack.c.b16 %v788, %v784
    %v1045 = vpack.c.b16 %v789, %v785
    %v1046 = vpack.c.b16 %v790, %v786
    %v1047 = vpack.c.b16 %v791, %v787
    %v1048 = vpack.c.b16 %v796, %v792
    %v1049 = vpack.c.b16 %v797, %v793
    %v1050 = vpack.c.b16 %v798, %v794
    %v1051 = vpack.c.b16 %v799, %v795
    %v1052 = vpack.c.b16 %v804, %v800
    %v1053 = vpack.c.b16 %v805, %v801
    %v1054 = vpack.c.b16 %v806, %v802
    %v1055 = vpack.c.b16 %v807, %v803
    %v1056 = vpack.c.b16 %v812, %v808
    %v1057 = vpack.c.b16 %v813, %v809
    %v1058 = vpack.c.b16 %v814, %v810
    %v1059 = vpack.c.b16 %v815, %v811
    %v1060 = vpack.c.b16 %v820, %v816
    %v1061 = vpack.c.b16 %v821, %v817
    %v1062 = vpack.c.b16 %v822, %v818
    %v1063 = vpack.c.b16 %v823, %v819
    %v1064 = vpack.c.b16 %v828, %v824
    %v1065 = vpack.c.b16 %v829, %v825
    %v1066 = vpack.c.b16 %v830, %v826
    %v1067 = vpack.c.b16 %v831, %v827
    %v1068 = vpack.c.b16 %v836, %v832
    %v1069 = vpack.c.b16 %v837, %v833
    %v1070 = vpack.c.b16 %v838, %v834
    %v1071 = vpack.c.b16 %v839, %v835
    %v1072 = vpack.c.b16 %v844, %v840
    %v1073 = vpack.c.b16 %v845, %v841
    %v1074 = vpack.c.b16 %v846, %v842
    %v1075 = vpack.c.b16 %v847, %v843
    %v1076 = vpack.c.b16 %v852, %v848
    %v1077 = vpack.c.b16 %v853, %v849
    %v1078 = vpack.c.b16 %v854, %v850
    %v1079 = vpack.c.b16 %v855, %v851
    %v1080 = vpack.c.b16 %v860, %v856
    %v1081 = vpack.c.b16 %v861, %v857
    %v1082 = vpack.c.b16 %v862, %v858
    %v1083 = vpack.c.b16 %v863, %v859
    %v1084 = vpack.c.b16 %v868, %v864
    %v1085 = vpack.c.b16 %v869, %v865
    %v1086 = vpack.c.b16 %v870, %v866
    %v1087 = vpack.c.b16 %v871, %v867
    %v1088 = vpack.c.b16 %v876, %v872
    %v1089 = vpack.c.b16 %v877, %v873
    %v1090 = vpack.c.b16 %v878, %v874
    %v1091 = vpack.c.b16 %v879, %v875
    %v1092 = vpack.c.b16 %v884, %v880
    %v1093 = vpack.c.b16 %v885, %v881
    %v1094 = vpack.c.b16 %v886, %v882
    %v1095 = vpack.c.b16 %v887, %v883
    %v1096 = vpack.c.b16 %v892, %v888
    %v1097 = vpack.c.b16 %v893, %v889
    %v1098 = vpack.c.b16 %v894, %v890
    %v1099 = vpack.c.b16 %v895, %v891
    %v1100 = vpack.c.b16 %v900, %v896
    %v1101 = vpack.c.b16 %v901, %v897
    %v1102 = vpack.c.b16 %v902, %v898
    %v1103 = vpack.c.b16 %v903, %v899
    %v1104 = vpack.c.b16 %v908, %v904
    %v1105 = vpack.c.b16 %v909, %v905
    %v1106 = vpack.c.b16 %v910, %v906
    %v1107 = vpack.c.b16 %v911, %v907
    %vm1304 = vcmask 130048
    %v1306 = vsel %vm1304, %v105, 0
    %1308 = vmatprep.subr.bf16.mxu0 %v941
    %1309 = vmatpush1.bf16.msra.mxu0 %v940
    %1310 = vmatprep.subr.bf16.mxu0 %v937
    %1311 = vmatpush1.bf16.msra.mxu0 %v936
    %1312 = vmatprep.subr.bf16.mxu0 %v933
    %1313 = vmatpush1.bf16.msra.mxu0 %v932
    %1314 = vmatprep.subr.bf16.mxu0 %v929
    %1315 = vmatpush1.bf16.msra.mxu0 %v928
    %1316 = vmatprep.subr.bf16.mxu0 %v925
    %1317 = vmatpush1.bf16.msra.mxu0 %v924
    %1318 = vmatprep.subr.bf16.mxu0 %v921
    %1319 = vmatpush1.bf16.msra.mxu0 %v920
    %1320 = vmatprep.subr.bf16.mxu0 %v917
    %1321 = vmatpush1.bf16.msra.mxu0 %v916
    %1322 = vmatprep.subr.bf16.mxu0 %v913
    %1323 = vmatpush1.bf16.msra.mxu0 %v912
    %1324 = vmatprep.subr.bf16.mxu0 %v973
    %1325 = vmatpush2.bf16.msra.mxu0 %v972
    %1326 = vmatprep.subr.bf16.mxu0 %v969
    %1327 = vmatpush2.bf16.msra.mxu0 %v968
    %1328 = vmatprep.subr.bf16.mxu0 %v965
    %1329 = vmatpush2.bf16.msra.mxu0 %v964
    %1330 = vmatprep.subr.bf16.mxu0 %v961
    %1331 = vmatpush2.bf16.msra.mxu0 %v960
    %1332 = vmatprep.subr.bf16.mxu0 %v957
    %1333 = vmatpush2.bf16.msra.mxu0 %v956
    %1334 = vmatprep.subr.bf16.mxu0 %v953
    %1335 = vmatpush2.bf16.msra.mxu0 %v952
    %1336 = vmatprep.subr.bf16.mxu0 %v949
    %1337 = vmatpush2.bf16.msra.mxu0 %v948
    %1338 = vmatprep.subr.bf16.mxu0 %v945
    %1339 = vmatpush2.bf16.msra.mxu0 %v944
    %1340 = vmatprep.mubr.bf16.mxu0 %v100
    %1341 = vmatmul.mubr.bf16.gmra.mxu0 %v99
    %v1342 = vpop.f32.mrf.mxu0
    %v1343 = vadd.f32 %v307, %v1342
    %v1344 = vpop.f32.mrf.mxu0
    %v1345 = vadd.f32 %v311, %v1344
    %v1346 = vpop.f32.mrf.mxu0
    %v1347 = vpop.f32.mrf.mxu0
    %1348 = vdwg.mxu0
    %1349 = vmatprep.subr.bf16.mxu0 %v1005
    %1350 = vmatpush1.bf16.msra.mxu0 %v1004
    %1351 = vmatprep.subr.bf16.mxu0 %v1001
    %1352 = vmatpush1.bf16.msra.mxu0 %v1000
    %1353 = vmatprep.subr.bf16.mxu0 %v997
    %1354 = vmatpush1.bf16.msra.mxu0 %v996
    %1355 = vmatprep.subr.bf16.mxu0 %v993
    %1356 = vmatpush1.bf16.msra.mxu0 %v992
    %1357 = vmatprep.subr.bf16.mxu0 %v989
    %1358 = vmatpush1.bf16.msra.mxu0 %v988
    %1359 = vmatprep.subr.bf16.mxu0 %v985
    %1360 = vmatpush1.bf16.msra.mxu0 %v984
    %1361 = vmatprep.subr.bf16.mxu0 %v981
    %1362 = vmatpush1.bf16.msra.mxu0 %v980
    %1363 = vmatprep.subr.bf16.mxu0 %v977
    %1364 = vmatpush1.bf16.msra.mxu0 %v976
    %1365 = vmatprep.subr.bf16.mxu0 %v1037
    %1366 = vmatpush2.bf16.msra.mxu0 %v1036
    %1367 = vmatprep.subr.bf16.mxu0 %v1033
    %1368 = vmatpush2.bf16.msra.mxu0 %v1032
    %1369 = vmatprep.subr.bf16.mxu0 %v1029
    %1370 = vmatpush2.bf16.msra.mxu0 %v1028
    %1371 = vmatprep.subr.bf16.mxu0 %v1025
    %1372 = vmatpush2.bf16.msra.mxu0 %v1024
    %1373 = vmatprep.subr.bf16.mxu0 %v1021
    %1374 = vmatpush2.bf16.msra.mxu0 %v1020
    %1375 = vmatprep.subr.bf16.mxu0 %v1017
    %1376 = vmatpush2.bf16.msra.mxu0 %v1016
    %1377 = vmatprep.subr.bf16.mxu0 %v1013
    %1378 = vmatpush2.bf16.msra.mxu0 %v1012
    %1379 = vmatprep.subr.bf16.mxu0 %v1009
    %1380 = vmatpush2.bf16.msra.mxu0 %v1008
    %1381 = vmatprep.mubr.bf16.mxu0 %v102
    %1382 = vmatmul.mubr.bf16.gmra.mxu0 %v101
    %v1383 = vpop.f32.mrf.mxu0
    %v1384 = vadd.f32 %v1343, %v1383
    %v1385 = vpop.f32.mrf.mxu0
    %v1386 = vadd.f32 %v1345, %v1385
    %v1387 = vpop.f32.mrf.mxu0
    %v1388 = vpop.f32.mrf.mxu0
    %1389 = vdwg.mxu0
    %1390 = vmatprep.subr.bf16.mxu0 %v1069
    %1391 = vmatpush1.bf16.msra.mxu0 %v1068
    %1392 = vmatprep.subr.bf16.mxu0 %v1065
    %1393 = vmatpush1.bf16.msra.mxu0 %v1064
    %1394 = vmatprep.subr.bf16.mxu0 %v1061
    %1395 = vmatpush1.bf16.msra.mxu0 %v1060
    %1396 = vmatprep.subr.bf16.mxu0 %v1057
    %1397 = vmatpush1.bf16.msra.mxu0 %v1056
    %1398 = vmatprep.subr.bf16.mxu0 %v1053
    %1399 = vmatpush1.bf16.msra.mxu0 %v1052
    %1400 = vmatprep.subr.bf16.mxu0 %v1049
    %1401 = vmatpush1.bf16.msra.mxu0 %v1048
    %1402 = vmatprep.subr.bf16.mxu0 %v1045
    %1403 = vmatpush1.bf16.msra.mxu0 %v1044
    %1404 = vmatprep.subr.bf16.mxu0 %v1041
    %1405 = vmatpush1.bf16.msra.mxu0 %v1040
    %1406 = vmatprep.subr.bf16.mxu0 %v1101
    %1407 = vmatpush2.bf16.msra.mxu0 %v1100
    %1408 = vmatprep.subr.bf16.mxu0 %v1097
    %1409 = vmatpush2.bf16.msra.mxu0 %v1096
    %1410 = vmatprep.subr.bf16.mxu0 %v1093
    %1411 = vmatpush2.bf16.msra.mxu0 %v1092
    %1412 = vmatprep.subr.bf16.mxu0 %v1089
    %1413 = vmatpush2.bf16.msra.mxu0 %v1088
    %1414 = vmatprep.subr.bf16.mxu0 %v1085
    %1415 = vmatpush2.bf16.msra.mxu0 %v1084
    %1416 = vmatprep.subr.bf16.mxu0 %v1081
    %1417 = vmatpush2.bf16.msra.mxu0 %v1080
    %1418 = vmatprep.subr.bf16.mxu0 %v1077
    %1419 = vmatpush2.bf16.msra.mxu0 %v1076
    %1420 = vmatprep.subr.bf16.mxu0 %v1073
    %1421 = vmatpush2.bf16.msra.mxu0 %v1072
    %1422 = vmatprep.mubr.bf16.mxu0 %v104
    %1423 = vmatmul.mubr.bf16.gmra.mxu0 %v103
    %v1424 = vpop.f32.mrf.mxu0
    %v1425 = vadd.f32 %v1384, %v1424
    %v1426 = vpop.f32.mrf.mxu0
    %v1427 = vadd.f32 %v1386, %v1426
    %v1428 = vpop.f32.mrf.mxu0
    %v1429 = vpop.f32.mrf.mxu0
    %1430 = vdwg.mxu0
    %1431 = vmatprep.subr.bf16.mxu0 0
    %1432 = vmatpush1.bf16.msra.mxu0 0
    %1433 = vmatprep.subr.bf16.mxu0 0
    %1434 = vmatpush1.bf16.msra.mxu0 0
    %1435 = vmatprep.subr.bf16.mxu0 0
    %1436 = vmatpush1.bf16.msra.mxu0 0
    %1437 = vmatprep.subr.bf16.mxu0 0
    %1438 = vmatpush1.bf16.msra.mxu0 0
    %1439 = vmatprep.subr.bf16.mxu0 0
    %1440 = vmatpush1.bf16.msra.mxu0 0
    %1441 = vmatprep.subr.bf16.mxu0 0
    %1442 = vmatpush1.bf16.msra.mxu0 0
    %1443 = vmatprep.subr.bf16.mxu0 0
    %1444 = vmatpush1.bf16.msra.mxu0 0
    %1445 = vmatprep.subr.bf16.mxu0 %v1105
    %1446 = vmatpush1.bf16.msra.mxu0 %v1104
    %1447 = vmatprep.subr.bf16.mxu0 0
    %1448 = vmatpush2.bf16.msra.mxu0 0
    %1449 = vmatprep.subr.bf16.mxu0 0
    %1450 = vmatpush2.bf16.msra.mxu0 0
    %1451 = vmatprep.subr.bf16.mxu0 0
    %1452 = vmatpush2.bf16.msra.mxu0 0
    %1453 = vmatprep.subr.bf16.mxu0 0
    %1454 = vmatpush2.bf16.msra.mxu0 0
    %1455 = vmatprep.subr.bf16.mxu0 0
    %1456 = vmatpush2.bf16.msra.mxu0 0
    %1457 = vmatprep.subr.bf16.mxu0 0
    %1458 = vmatpush2.bf16.msra.mxu0 0
    %1459 = vmatprep.subr.bf16.mxu0 0
    %1460 = vmatpush2.bf16.msra.mxu0 0
    %1461 = vmatprep.subr.bf16.mxu0 0
    %1462 = vmatpush2.bf16.msra.mxu0 0
    %1463 = vmatprep.mubr.bf16.mxu0 0
    %1464 = vmatmul.mubr.bf16.gmra.mxu0 %v1306
    %v1465 = vpop.f32.mrf.mxu0
    %v1466 = vadd.f32 %v1425, %v1465
    %v1467 = vpop.f32.mrf.mxu0
    %v1468 = vadd.f32 %v1427, %v1467
    %v1469 = vpop.f32.mrf.mxu0
    %v1470 = vpop.f32.mrf.mxu0
    %1471 = vdwg.mxu0
    %1472 = vmatprep.subr.bf16.mxu0 %v943
    %1473 = vmatpush1.bf16.msra.mxu0 %v942
    %1474 = vmatprep.subr.bf16.mxu0 %v939
    %1475 = vmatpush1.bf16.msra.mxu0 %v938
    %1476 = vmatprep.subr.bf16.mxu0 %v935
    %1477 = vmatpush1.bf16.msra.mxu0 %v934
    %1478 = vmatprep.subr.bf16.mxu0 %v931
    %1479 = vmatpush1.bf16.msra.mxu0 %v930
    %1480 = vmatprep.subr.bf16.mxu0 %v927
    %1481 = vmatpush1.bf16.msra.mxu0 %v926
    %1482 = vmatprep.subr.bf16.mxu0 %v923
    %1483 = vmatpush1.bf16.msra.mxu0 %v922
    %1484 = vmatprep.subr.bf16.mxu0 %v919
    %1485 = vmatpush1.bf16.msra.mxu0 %v918
    %1486 = vmatprep.subr.bf16.mxu0 %v915
    %1487 = vmatpush1.bf16.msra.mxu0 %v914
    %1488 = vmatprep.subr.bf16.mxu0 %v975
    %1489 = vmatpush2.bf16.msra.mxu0 %v974
    %1490 = vmatprep.subr.bf16.mxu0 %v971
    %1491 = vmatpush2.bf16.msra.mxu0 %v970
    %1492 = vmatprep.subr.bf16.mxu0 %v967
    %1493 = vmatpush2.bf16.msra.mxu0 %v966
    %1494 = vmatprep.subr.bf16.mxu0 %v963
    %1495 = vmatpush2.bf16.msra.mxu0 %v962
    %1496 = vmatprep.subr.bf16.mxu0 %v959
    %1497 = vmatpush2.bf16.msra.mxu0 %v958
    %1498 = vmatprep.subr.bf16.mxu0 %v955
    %1499 = vmatpush2.bf16.msra.mxu0 %v954
    %1500 = vmatprep.subr.bf16.mxu0 %v951
    %1501 = vmatpush2.bf16.msra.mxu0 %v950
    %1502 = vmatprep.subr.bf16.mxu0 %v947
    %1503 = vmatpush2.bf16.msra.mxu0 %v946
    %1504 = vmatprep.mubr.bf16.mxu0 %v100
    %1505 = vmatmul.mubr.bf16.gmra.mxu0 %v99
    %v1506 = vpop.f32.mrf.mxu0
    %v1507 = vadd.f32 %v315, %v1506
    %v1508 = vpop.f32.mrf.mxu0
    %v1509 = vadd.f32 %v319, %v1508
    %v1510 = vpop.f32.mrf.mxu0
    %v1511 = vpop.f32.mrf.mxu0
    %1512 = vdwg.mxu0
    %1513 = vmatprep.subr.bf16.mxu0 %v1007
    %1514 = vmatpush1.bf16.msra.mxu0 %v1006
    %1515 = vmatprep.subr.bf16.mxu0 %v1003
    %1516 = vmatpush1.bf16.msra.mxu0 %v1002
    %1517 = vmatprep.subr.bf16.mxu0 %v999
    %1518 = vmatpush1.bf16.msra.mxu0 %v998
    %1519 = vmatprep.subr.bf16.mxu0 %v995
    %1520 = vmatpush1.bf16.msra.mxu0 %v994
    %1521 = vmatprep.subr.bf16.mxu0 %v991
    %1522 = vmatpush1.bf16.msra.mxu0 %v990
    %1523 = vmatprep.subr.bf16.mxu0 %v987
    %1524 = vmatpush1.bf16.msra.mxu0 %v986
    %1525 = vmatprep.subr.bf16.mxu0 %v983
    %1526 = vmatpush1.bf16.msra.mxu0 %v982
    %1527 = vmatprep.subr.bf16.mxu0 %v979
    %1528 = vmatpush1.bf16.msra.mxu0 %v978
    %1529 = vmatprep.subr.bf16.mxu0 %v1039
    %1530 = vmatpush2.bf16.msra.mxu0 %v1038
    %1531 = vmatprep.subr.bf16.mxu0 %v1035
    %1532 = vmatpush2.bf16.msra.mxu0 %v1034
    %1533 = vmatprep.subr.bf16.mxu0 %v1031
    %1534 = vmatpush2.bf16.msra.mxu0 %v1030
    %1535 = vmatprep.subr.bf16.mxu0 %v1027
    %1536 = vmatpush2.bf16.msra.mxu0 %v1026
    %1537 = vmatprep.subr.bf16.mxu0 %v1023
    %1538 = vmatpush2.bf16.msra.mxu0 %v1022
    %1539 = vmatprep.subr.bf16.mxu0 %v1019
    %1540 = vmatpush2.bf16.msra.mxu0 %v1018
    %1541 = vmatprep.subr.bf16.mxu0 %v1015
    %1542 = vmatpush2.bf16.msra.mxu0 %v1014
    %1543 = vmatprep.subr.bf16.mxu0 %v1011
    %1544 = vmatpush2.bf16.msra.mxu0 %v1010
    %1545 = vmatprep.mubr.bf16.mxu0 %v102
    %1546 = vmatmul.mubr.bf16.gmra.mxu0 %v101
    %v1547 = vpop.f32.mrf.mxu0
    %v1548 = vadd.f32 %v1507, %v1547
    %v1549 = vpop.f32.mrf.mxu0
    %v1550 = vadd.f32 %v1509, %v1549
    %v1551 = vpop.f32.mrf.mxu0
    %v1552 = vpop.f32.mrf.mxu0
    %1553 = vdwg.mxu0
    %1554 = vmatprep.subr.bf16.mxu0 %v1071
    %1555 = vmatpush1.bf16.msra.mxu0 %v1070
    %1556 = vmatprep.subr.bf16.mxu0 %v1067
    %1557 = vmatpush1.bf16.msra.mxu0 %v1066
    %1558 = vmatprep.subr.bf16.mxu0 %v1063
    %1559 = vmatpush1.bf16.msra.mxu0 %v1062
    %1560 = vmatprep.subr.bf16.mxu0 %v1059
    %1561 = vmatpush1.bf16.msra.mxu0 %v1058
    %1562 = vmatprep.subr.bf16.mxu0 %v1055
    %1563 = vmatpush1.bf16.msra.mxu0 %v1054
    %1564 = vmatprep.subr.bf16.mxu0 %v1051
    %1565 = vmatpush1.bf16.msra.mxu0 %v1050
    %1566 = vmatprep.subr.bf16.mxu0 %v1047
    %1567 = vmatpush1.bf16.msra.mxu0 %v1046
    %1568 = vmatprep.subr.bf16.mxu0 %v1043
    %1569 = vmatpush1.bf16.msra.mxu0 %v1042
    %1570 = vmatprep.subr.bf16.mxu0 %v1103
    %1571 = vmatpush2.bf16.msra.mxu0 %v1102
    %1572 = vmatprep.subr.bf16.mxu0 %v1099
    %1573 = vmatpush2.bf16.msra.mxu0 %v1098
    %1574 = vmatprep.subr.bf16.mxu0 %v1095
    %1575 = vmatpush2.bf16.msra.mxu0 %v1094
    %1576 = vmatprep.subr.bf16.mxu0 %v1091
    %1577 = vmatpush2.bf16.msra.mxu0 %v1090
    %1578 = vmatprep.subr.bf16.mxu0 %v1087
    %1579 = vmatpush2.bf16.msra.mxu0 %v1086
    %1580 = vmatprep.subr.bf16.mxu0 %v1083
    %1581 = vmatpush2.bf16.msra.mxu0 %v1082
    %1582 = vmatprep.subr.bf16.mxu0 %v1079
    %1583 = vmatpush2.bf16.msra.mxu0 %v1078
    %1584 = vmatprep.subr.bf16.mxu0 %v1075
    %1585 = vmatpush2.bf16.msra.mxu0 %v1074
    %1586 = vmatprep.mubr.bf16.mxu0 %v104
    %1587 = vmatmul.mubr.bf16.gmra.mxu0 %v103
    %v1588 = vpop.f32.mrf.mxu0
    %v1589 = vadd.f32 %v1548, %v1588
    %v1590 = vpop.f32.mrf.mxu0
    %v1591 = vadd.f32 %v1550, %v1590
    %v1592 = vpop.f32.mrf.mxu0
    %v1593 = vpop.f32.mrf.mxu0
    %1594 = vdwg.mxu0
    %1595 = vmatprep.subr.bf16.mxu0 0
    %1596 = vmatpush1.bf16.msra.mxu0 0
    %1597 = vmatprep.subr.bf16.mxu0 0
    %1598 = vmatpush1.bf16.msra.mxu0 0
    %1599 = vmatprep.subr.bf16.mxu0 0
    %1600 = vmatpush1.bf16.msra.mxu0 0
    %1601 = vmatprep.subr.bf16.mxu0 0
    %1602 = vmatpush1.bf16.msra.mxu0 0
    %1603 = vmatprep.subr.bf16.mxu0 0
    %1604 = vmatpush1.bf16.msra.mxu0 0
    %1605 = vmatprep.subr.bf16.mxu0 0
    %1606 = vmatpush1.bf16.msra.mxu0 0
    %1607 = vmatprep.subr.bf16.mxu0 0
    %1608 = vmatpush1.bf16.msra.mxu0 0
    %1609 = vmatprep.subr.bf16.mxu0 %v1107
    %1610 = vmatpush1.bf16.msra.mxu0 %v1106
    %1611 = vmatprep.subr.bf16.mxu0 0
    %1612 = vmatpush2.bf16.msra.mxu0 0
    %1613 = vmatprep.subr.bf16.mxu0 0
    %1614 = vmatpush2.bf16.msra.mxu0 0
    %1615 = vmatprep.subr.bf16.mxu0 0
    %1616 = vmatpush2.bf16.msra.mxu0 0
    %1617 = vmatprep.subr.bf16.mxu0 0
    %1618 = vmatpush2.bf16.msra.mxu0 0
    %1619 = vmatprep.subr.bf16.mxu0 0
    %1620 = vmatpush2.bf16.msra.mxu0 0
    %1621 = vmatprep.subr.bf16.mxu0 0
    %1622 = vmatpush2.bf16.msra.mxu0 0
    %1623 = vmatprep.subr.bf16.mxu0 0
    %1624 = vmatpush2.bf16.msra.mxu0 0
    %1625 = vmatprep.subr.bf16.mxu0 0
    %1626 = vmatpush2.bf16.msra.mxu0 0
    %1627 = vmatprep.mubr.bf16.mxu0 0
    %1628 = vmatmul.mubr.bf16.gmra.mxu0 %v1306
    %v1629 = vpop.f32.mrf.mxu0
    %v1630 = vadd.f32 %v1589, %v1629
    %v1631 = vpop.f32.mrf.mxu0
    %v1632 = vadd.f32 %v1591, %v1631
    %v1633 = vpop.f32.mrf.mxu0
    %v1634 = vpop.f32.mrf.mxu0
    %1635 = vdwg.mxu0
    %v1636 = vmax.f32 %v1466, 0.0
    %v1637 = vmax.f32 %v1468, 0.0
    %v1638 = vmax.f32 %v1630, 0.0
    %v1639 = vmax.f32 %v1632, 0.0
    %v1640 = vpack.c.bf16 %v1636, %v1636
    %v1641 = vpack.c.bf16 %v1637, %v1637
    %v1642 = vpack.c.bf16 %v1638, %v1638
    %v1643 = vpack.c.bf16 %v1639, %v1639
    %v1644 = vld [vmem:[#allocation8] sm:$0xf]
    %v1645 = vld [vmem:[#allocation8 + $0x4] sm:$0xf]
    %v1646 = vld [vmem:[#allocation8 + $0x8] sm:$0xf]
    %v1647 = vld [vmem:[#allocation8 + $0xc] sm:$0xf]
    %v1648 = vld [vmem:[#allocation8 + $0x10] sm:$0xf]
    %v1649 = vld [vmem:[#allocation8 + $0x14] sm:$0xf]
    %v1650 = vld [vmem:[#allocation8 + $0x18] sm:$0xf]
    %v1651 = vld [vmem:[#allocation8 + $0x1c] sm:$0xf]
    %v1652 = vld [vmem:[#allocation8 + $0x20] sm:$0xf]
    %v1653 = vld [vmem:[#allocation8 + $0x24] sm:$0xf]
    %v1654 = vld [vmem:[#allocation8 + $0x28] sm:$0xf]
    %v1655 = vld [vmem:[#allocation8 + $0x2c] sm:$0xf]
    %v1656 = vld [vmem:[#allocation8 + $0x30] sm:$0xf]
    %v1657 = vld [vmem:[#allocation8 + $0x34] sm:$0xf]
    %v1658 = vld [vmem:[#allocation8 + $0x38] sm:$0xf]
    %v1659 = vld [vmem:[#allocation8 + $0x3c] sm:$0xf]
    %v1660 = vld [vmem:[#allocation8 + $0x40] sm:$0xf]
    %v1661 = vld [vmem:[#allocation8 + $0x44] sm:$0xf]
    %v1662 = vld [vmem:[#allocation8 + $0x48] sm:$0xf]
    %v1663 = vld [vmem:[#allocation8 + $0x4c] sm:$0xf]
    %v1664 = vld [vmem:[#allocation8 + $0x50] sm:$0xf]
    %v1665 = vld [vmem:[#allocation8 + $0x54] sm:$0xf]
    %v1666 = vld [vmem:[#allocation8 + $0x58] sm:$0xf]
    %v1667 = vld [vmem:[#allocation8 + $0x5c] sm:$0xf]
    %v1668 = vld [vmem:[#allocation8 + $0x60] sm:$0xf]
    %v1669 = vld [vmem:[#allocation8 + $0x64] sm:$0xf]
    %v1670 = vld [vmem:[#allocation8 + $0x68] sm:$0xf]
    %v1671 = vld [vmem:[#allocation8 + $0x6c] sm:$0xf]
    %v1672 = vld [vmem:[#allocation8 + $0x70] sm:$0xf]
    %v1673 = vld [vmem:[#allocation8 + $0x74] sm:$0xf]
    %v1674 = vld [vmem:[#allocation8 + $0x78] sm:$0xf]
    %v1675 = vld [vmem:[#allocation8 + $0x7c] sm:$0xf]
    %v1676 = vld [vmem:[#allocation8 + $0x80] sm:$0xf]
    %v1677 = vld [vmem:[#allocation8 + $0x84] sm:$0xf]
    %v1678 = vld [vmem:[#allocation8 + $0x88] sm:$0xf]
    %v1679 = vld [vmem:[#allocation8 + $0x8c] sm:$0xf]
    %v1680 = vld [vmem:[#allocation8 + $0x90] sm:$0xf]
    %v1681 = vld [vmem:[#allocation8 + $0x94] sm:$0xf]
    %v1682 = vld [vmem:[#allocation8 + $0x98] sm:$0xf]
    %v1683 = vld [vmem:[#allocation8 + $0x9c] sm:$0xf]
    %v1684 = vld [vmem:[#allocation8 + $0xa0] sm:$0xf]
    %v1685 = vld [vmem:[#allocation8 + $0xa4] sm:$0xf]
    %v1686 = vld [vmem:[#allocation8 + $0xa8] sm:$0xf]
    %v1687 = vld [vmem:[#allocation8 + $0xac] sm:$0xf]
    %v1688 = vld [vmem:[#allocation8 + $0xb0] sm:$0xf]
    %v1689 = vld [vmem:[#allocation8 + $0xb4] sm:$0xf]
    %v1690 = vld [vmem:[#allocation8 + $0xb8] sm:$0xf]
    %v1691 = vld [vmem:[#allocation8 + $0xbc] sm:$0xf]
    %v1692 = vld [vmem:[#allocation8 + $0xc0] sm:$0xf]
    %v1693 = vld [vmem:[#allocation8 + $0xc4] sm:$0xf]
    %v1694 = vld [vmem:[#allocation8 + $0xc8] sm:$0xf]
    %v1695 = vld [vmem:[#allocation8 + $0xcc] sm:$0xf]
    %v1696 = vld [vmem:[#allocation8 + $0xd0] sm:$0xf]
    %v1697 = vld [vmem:[#allocation8 + $0xd4] sm:$0xf]
    %v1698 = vld [vmem:[#allocation8 + $0xd8] sm:$0xf]
    %v1699 = vld [vmem:[#allocation8 + $0xdc] sm:$0xf]
    %v1700 = vld [vmem:[#allocation8 + $0xe0] sm:$0xf]
    %v1701 = vld [vmem:[#allocation8 + $0xe4] sm:$0xf]
    %v1702 = vld [vmem:[#allocation8 + $0xe8] sm:$0xf]
    %v1703 = vld [vmem:[#allocation8 + $0xec] sm:$0xf]
    %v1704 = vld [vmem:[#allocation8 + $0xf0] sm:$0xf]
    %v1705 = vld [vmem:[#allocation8 + $0xf4] sm:$0xf]
    %v1706 = vld [vmem:[#allocation8 + $0xf8] sm:$0xf]
    %v1707 = vld [vmem:[#allocation8 + $0xfc] sm:$0xf]
    %v1708 = vld [vmem:[%s4] sm:$0x1]
    %v1710 = vlaneseq
    %v1711 = vshrl.u32 %v1710, 7
    %v1712 = vsub.s32 0, %v1711
    %v1713 = vrot.slane %v1708, %v1712
    %v1779 = vunpack.c.l.b16 %v1644
    %v1780 = vunpack.c.l.b16 %v1645
    %v1781 = vunpack.c.l.b16 %v1646
    %v1782 = vunpack.c.l.b16 %v1647
    %v1783 = vunpack.c.l.b16 %v1648
    %v1784 = vunpack.c.l.b16 %v1649
    %v1785 = vunpack.c.l.b16 %v1650
    %v1786 = vunpack.c.l.b16 %v1651
    %v1787 = vunpack.c.l.b16 %v1652
    %v1788 = vunpack.c.l.b16 %v1653
    %v1789 = vunpack.c.l.b16 %v1654
    %v1790 = vunpack.c.l.b16 %v1655
    %v1791 = vunpack.c.l.b16 %v1656
    %v1792 = vunpack.c.l.b16 %v1657
    %v1793 = vunpack.c.l.b16 %v1658
    %v1794 = vunpack.c.l.b16 %v1659
    %v1795 = vunpack.c.l.b16 %v1660
    %v1796 = vunpack.c.l.b16 %v1661
    %v1797 = vunpack.c.l.b16 %v1662
    %v1798 = vunpack.c.l.b16 %v1663
    %v1799 = vunpack.c.l.b16 %v1664
    %v1800 = vunpack.c.l.b16 %v1665
    %v1801 = vunpack.c.l.b16 %v1666
    %v1802 = vunpack.c.l.b16 %v1667
    %v1803 = vunpack.c.l.b16 %v1668
    %v1804 = vunpack.c.l.b16 %v1669
    %v1805 = vunpack.c.l.b16 %v1670
    %v1806 = vunpack.c.l.b16 %v1671
    %v1807 = vunpack.c.l.b16 %v1672
    %v1808 = vunpack.c.l.b16 %v1673
    %v1809 = vunpack.c.l.b16 %v1674
    %v1810 = vunpack.c.l.b16 %v1675
    %v1811 = vunpack.c.l.b16 %v1676
    %v1812 = vunpack.c.l.b16 %v1677
    %v1813 = vunpack.c.l.b16 %v1678
    %v1814 = vunpack.c.l.b16 %v1679
    %v1815 = vunpack.c.l.b16 %v1680
    %v1816 = vunpack.c.l.b16 %v1681
    %v1817 = vunpack.c.l.b16 %v1682
    %v1818 = vunpack.c.l.b16 %v1683
    %v1819 = vunpack.c.l.b16 %v1684
    %v1820 = vunpack.c.l.b16 %v1685
    %v1821 = vunpack.c.l.b16 %v1686
    %v1822 = vunpack.c.l.b16 %v1687
    %v1823 = vunpack.c.l.b16 %v1688
    %v1824 = vunpack.c.l.b16 %v1689
    %v1825 = vunpack.c.l.b16 %v1690
    %v1826 = vunpack.c.l.b16 %v1691
    %v1827 = vunpack.c.l.b16 %v1692
    %v1828 = vunpack.c.l.b16 %v1693
    %v1829 = vunpack.c.l.b16 %v1694
    %v1830 = vunpack.c.l.b16 %v1695
    %v1831 = vunpack.c.l.b16 %v1696
    %v1832 = vunpack.c.l.b16 %v1697
    %v1833 = vunpack.c.l.b16 %v1698
    %v1834 = vunpack.c.l.b16 %v1699
    %v1835 = vunpack.c.l.b16 %v1700
    %v1836 = vunpack.c.l.b16 %v1701
    %v1837 = vunpack.c.l.b16 %v1702
    %v1838 = vunpack.c.l.b16 %v1703
    %v1839 = vunpack.c.l.b16 %v1704
    %v1840 = vunpack.c.l.b16 %v1705
    %v1841 = vunpack.c.l.b16 %v1706
    %v1842 = vunpack.c.l.b16 %v1707
    %v1843 = vpack.c.b16 %v1780, %v1779
    %v1844 = vpack.c.b16 %v1782, %v1781
    %v1845 = vpack.c.b16 %v1784, %v1783
    %v1846 = vpack.c.b16 %v1786, %v1785
    %v1847 = vpack.c.b16 %v1788, %v1787
    %v1848 = vpack.c.b16 %v1790, %v1789
    %v1849 = vpack.c.b16 %v1792, %v1791
    %v1850 = vpack.c.b16 %v1794, %v1793
    %v1851 = vpack.c.b16 %v1796, %v1795
    %v1852 = vpack.c.b16 %v1798, %v1797
    %v1853 = vpack.c.b16 %v1800, %v1799
    %v1854 = vpack.c.b16 %v1802, %v1801
    %v1855 = vpack.c.b16 %v1804, %v1803
    %v1856 = vpack.c.b16 %v1806, %v1805
    %v1857 = vpack.c.b16 %v1808, %v1807
    %v1858 = vpack.c.b16 %v1810, %v1809
    %v1859 = vpack.c.b16 %v1812, %v1811
    %v1860 = vpack.c.b16 %v1814, %v1813
    %v1861 = vpack.c.b16 %v1816, %v1815
    %v1862 = vpack.c.b16 %v1818, %v1817
    %v1863 = vpack.c.b16 %v1820, %v1819
    %v1864 = vpack.c.b16 %v1822, %v1821
    %v1865 = vpack.c.b16 %v1824, %v1823
    %v1866 = vpack.c.b16 %v1826, %v1825
    %v1867 = vpack.c.b16 %v1828, %v1827
    %v1868 = vpack.c.b16 %v1830, %v1829
    %v1869 = vpack.c.b16 %v1832, %v1831
    %v1870 = vpack.c.b16 %v1834, %v1833
    %v1871 = vpack.c.b16 %v1836, %v1835
    %v1872 = vpack.c.b16 %v1838, %v1837
    %v1873 = vpack.c.b16 %v1840, %v1839
    %v1874 = vpack.c.b16 %v1842, %v1841
    %1907 = vmatprep.subr.bf16.mxu0 0
    %1908 = vmatpush1.bf16.msra.mxu0 %v1850
    %1909 = vmatprep.subr.bf16.mxu0 0
    %1910 = vmatpush1.bf16.msra.mxu0 %v1849
    %1911 = vmatprep.subr.bf16.mxu0 0
    %1912 = vmatpush1.bf16.msra.mxu0 %v1848
    %1913 = vmatprep.subr.bf16.mxu0 0
    %1914 = vmatpush1.bf16.msra.mxu0 %v1847
    %1915 = vmatprep.subr.bf16.mxu0 0
    %1916 = vmatpush1.bf16.msra.mxu0 %v1846
    %1917 = vmatprep.subr.bf16.mxu0 0
    %1918 = vmatpush1.bf16.msra.mxu0 %v1845
    %1919 = vmatprep.subr.bf16.mxu0 0
    %1920 = vmatpush1.bf16.msra.mxu0 %v1844
    %1921 = vmatprep.subr.bf16.mxu0 0
    %1922 = vmatpush1.bf16.msra.mxu0 %v1843
    %1923 = vmatprep.subr.bf16.mxu0 0
    %1924 = vmatpush2.bf16.msra.mxu0 %v1858
    %1925 = vmatprep.subr.bf16.mxu0 0
    %1926 = vmatpush2.bf16.msra.mxu0 %v1857
    %1927 = vmatprep.subr.bf16.mxu0 0
    %1928 = vmatpush2.bf16.msra.mxu0 %v1856
    %1929 = vmatprep.subr.bf16.mxu0 0
    %1930 = vmatpush2.bf16.msra.mxu0 %v1855
    %1931 = vmatprep.subr.bf16.mxu0 0
    %1932 = vmatpush2.bf16.msra.mxu0 %v1854
    %1933 = vmatprep.subr.bf16.mxu0 0
    %1934 = vmatpush2.bf16.msra.mxu0 %v1853
    %1935 = vmatprep.subr.bf16.mxu0 0
    %1936 = vmatpush2.bf16.msra.mxu0 %v1852
    %1937 = vmatprep.subr.bf16.mxu0 0
    %1938 = vmatpush2.bf16.msra.mxu0 %v1851
    %1939 = vmatprep.mubr.bf16.mxu0 %v1641
    %1940 = vmatmul.mubr.bf16.gmra.mxu0 %v1640
    %v1941 = vpop.f32.mrf.mxu0
    %v1942 = vadd.f32 %v1713, %v1941
    %v1943 = vpop.f32.mrf.mxu0
    %v1944 = vpop.f32.mrf.mxu0
    %v1945 = vpop.f32.mrf.mxu0
    %1946 = vdwg.mxu0
    %1947 = vmatprep.subr.bf16.mxu0 0
    %1948 = vmatpush1.bf16.msra.mxu0 %v1866
    %1949 = vmatprep.subr.bf16.mxu0 0
    %1950 = vmatpush1.bf16.msra.mxu0 %v1865
    %1951 = vmatprep.subr.bf16.mxu0 0
    %1952 = vmatpush1.bf16.msra.mxu0 %v1864
    %1953 = vmatprep.subr.bf16.mxu0 0
    %1954 = vmatpush1.bf16.msra.mxu0 %v1863
    %1955 = vmatprep.subr.bf16.mxu0 0
    %1956 = vmatpush1.bf16.msra.mxu0 %v1862
    %1957 = vmatprep.subr.bf16.mxu0 0
    %1958 = vmatpush1.bf16.msra.mxu0 %v1861
    %1959 = vmatprep.subr.bf16.mxu0 0
    %1960 = vmatpush1.bf16.msra.mxu0 %v1860
    %1961 = vmatprep.subr.bf16.mxu0 0
    %1962 = vmatpush1.bf16.msra.mxu0 %v1859
    %1963 = vmatprep.subr.bf16.mxu0 0
    %1964 = vmatpush2.bf16.msra.mxu0 %v1874
    %1965 = vmatprep.subr.bf16.mxu0 0
    %1966 = vmatpush2.bf16.msra.mxu0 %v1873
    %1967 = vmatprep.subr.bf16.mxu0 0
    %1968 = vmatpush2.bf16.msra.mxu0 %v1872
    %1969 = vmatprep.subr.bf16.mxu0 0
    %1970 = vmatpush2.bf16.msra.mxu0 %v1871
    %1971 = vmatprep.subr.bf16.mxu0 0
    %1972 = vmatpush2.bf16.msra.mxu0 %v1870
    %1973 = vmatprep.subr.bf16.mxu0 0
    %1974 = vmatpush2.bf16.msra.mxu0 %v1869
    %1975 = vmatprep.subr.bf16.mxu0 0
    %1976 = vmatpush2.bf16.msra.mxu0 %v1868
    %1977 = vmatprep.subr.bf16.mxu0 0
    %1978 = vmatpush2.bf16.msra.mxu0 %v1867
    %1979 = vmatprep.mubr.bf16.mxu0 %v1643
    %1980 = vmatmul.mubr.bf16.gmra.mxu0 %v1642
    %v1981 = vpop.f32.mrf.mxu0
    %v1982 = vadd.f32 %v1942, %v1981
    %v1983 = vpop.f32.mrf.mxu0
    %v1984 = vpop.f32.mrf.mxu0
    %v1985 = vpop.f32.mrf.mxu0
    %1986 = vdwg.mxu0
    %v1987 = vmax.f32 %v1982, 0.0
    %v1988 = vpack.c.bf16 %v1987, %v1987
    %v1989 = vld [vmem:[#allocation10] sm:$0xf]
    %v1990 = vld [vmem:[#allocation10 + $0x4] sm:$0xf]
    %v1991 = vld [vmem:[#allocation10 + $0x8] sm:$0xf]
    %v1992 = vld [vmem:[#allocation10 + $0xc] sm:$0xf]
    %v1993 = vld [vmem:[#allocation10 + $0x10] sm:$0xf]
    %v1994 = vld [vmem:[#allocation10 + $0x14] sm:$0xf]
    %v1995 = vld [vmem:[#allocation10 + $0x18] sm:$0xf]
    %v1996 = vld [vmem:[#allocation10 + $0x1c] sm:$0xf]
    %v1997 = vld [vmem:[#allocation10 + $0x20] sm:$0xf]
    %v1998 = vld [vmem:[#allocation10 + $0x24] sm:$0xf]
    %v1999 = vld [vmem:[#allocation10 + $0x28] sm:$0xf]
    %v2000 = vld [vmem:[#allocation10 + $0x2c] sm:$0xf]
    %v2001 = vld [vmem:[#allocation10 + $0x30] sm:$0xf]
    %v2002 = vld [vmem:[#allocation10 + $0x34] sm:$0xf]
    %v2003 = vld [vmem:[#allocation10 + $0x38] sm:$0xf]
    %v2004 = vld [vmem:[#allocation10 + $0x3c] sm:$0xf]
    %v2005 = vld [vmem:[%s6] sm:$0x1]
    %v2007 = vlaneseq
    %v2008 = vshrl.u32 %v2007, 7
    %v2009 = vsub.s32 0, %v2008
    %v2010 = vrot.slane %v2005, %v2009
    %v2028 = vunpack.c.l.b16 %v1989
    %v2029 = vunpack.c.l.b16 %v1990
    %v2030 = vunpack.c.l.b16 %v1991
    %v2031 = vunpack.c.l.b16 %v1992
    %v2032 = vunpack.c.l.b16 %v1993
    %v2033 = vunpack.c.l.b16 %v1994
    %v2034 = vunpack.c.l.b16 %v1995
    %v2035 = vunpack.c.l.b16 %v1996
    %v2036 = vunpack.c.l.b16 %v1997
    %v2037 = vunpack.c.l.b16 %v1998
    %v2038 = vunpack.c.l.b16 %v1999
    %v2039 = vunpack.c.l.b16 %v2000
    %v2040 = vunpack.c.l.b16 %v2001
    %v2041 = vunpack.c.l.b16 %v2002
    %v2042 = vunpack.c.l.b16 %v2003
    %v2043 = vunpack.c.l.b16 %v2004
    %v2044 = vpack.c.b16 %v2029, %v2028
    %v2045 = vpack.c.b16 %v2031, %v2030
    %v2046 = vpack.c.b16 %v2033, %v2032
    %v2047 = vpack.c.b16 %v2035, %v2034
    %v2048 = vpack.c.b16 %v2037, %v2036
    %v2049 = vpack.c.b16 %v2039, %v2038
    %v2050 = vpack.c.b16 %v2041, %v2040
    %v2051 = vpack.c.b16 %v2043, %v2042
    %2060 = vmatprep.subr.bf16.mxu0 0
    %2061 = vmatpush1.bf16.msra.mxu0 %v2051
    %2062 = vmatprep.subr.bf16.mxu0 0
    %2063 = vmatpush1.bf16.msra.mxu0 %v2050
    %2064 = vmatprep.subr.bf16.mxu0 0
    %2065 = vmatpush1.bf16.msra.mxu0 %v2049
    %2066 = vmatprep.subr.bf16.mxu0 0
    %2067 = vmatpush1.bf16.msra.mxu0 %v2048
    %2068 = vmatprep.subr.bf16.mxu0 0
    %2069 = vmatpush1.bf16.msra.mxu0 %v2047
    %2070 = vmatprep.subr.bf16.mxu0 0
    %2071 = vmatpush1.bf16.msra.mxu0 %v2046
    %2072 = vmatprep.subr.bf16.mxu0 0
    %2073 = vmatpush1.bf16.msra.mxu0 %v2045
    %2074 = vmatprep.subr.bf16.mxu0 0
    %2075 = vmatpush1.bf16.msra.mxu0 %v2044
    %2076 = vmatprep.subr.bf16.mxu0 0
    %2077 = vmatpush2.bf16.msra.mxu0 0
    %2078 = vmatprep.subr.bf16.mxu0 0
    %2079 = vmatpush2.bf16.msra.mxu0 0
    %2080 = vmatprep.subr.bf16.mxu0 0
    %2081 = vmatpush2.bf16.msra.mxu0 0
    %2082 = vmatprep.subr.bf16.mxu0 0
    %2083 = vmatpush2.bf16.msra.mxu0 0
    %2084 = vmatprep.subr.bf16.mxu0 0
    %2085 = vmatpush2.bf16.msra.mxu0 0
    %2086 = vmatprep.subr.bf16.mxu0 0
    %2087 = vmatpush2.bf16.msra.mxu0 0
    %2088 = vmatprep.subr.bf16.mxu0 0
    %2089 = vmatpush2.bf16.msra.mxu0 0
    %2090 = vmatprep.subr.bf16.mxu0 0
    %2091 = vmatpush2.bf16.msra.mxu0 0
    %2092 = vmatprep.mubr.bf16.mxu0 0
    %2093 = vmatmul.mubr.bf16.gmra.mxu0 %v1988
    %v2094 = vpop.f32.mrf.mxu0
    %v2095 = vadd.f32 %v2010, %v2094
    %v2096 = vpop.f32.mrf.mxu0
    %v2097 = vpop.f32.mrf.mxu0
    %v2098 = vpop.f32.mrf.mxu0
    %2099 = vdwg.mxu0
    %v2100 = vmax.f32 %v2095, 0.0
    %v2101 = vlaneseq
    %v2102 = vand.u32 %v2101, 127
    %vm2103 = vcmp.lt.s32.totalorder %v2102, 10
    %v2104 = vsel %vm2103, %v2100, -inf
    %2105 = vmax.xlane.f32.xlu0 %v2104
    %v2106 = vpop.xlane.xlu0 %2105
    %v2107 = vsub.f32 %v2104, %v2106
    %v2108 = vmul.f32 %v2107, 1.442695
    %v2109 = vpow.pop %v2108
    %2110 = vadd.xlane.f32.xlu0 %v2109
    %v2111 = vpop.xlane.xlu0 %2110
    %v2112 = vrcp.pop %v2111
    %v2113 = vmul.f32 %v2109, %v2112
    %v2114 = vpack.c.bf16 %v2113, %v2113
    %2115 = vst [vmem:[#allocation11] sm:$0xf] %v2114
    // Predicated region
    $region50: #{tpu_custom_call.1} parent=1 // pred_check
      _
    $region51: #{tpu_custom_call.1} parent=1 // pred_check_branch
      %2117 = sbr.rel (0) target = $region53
    $region52: #{tpu_custom_call.1} parent=1 // pred_region
      %s2119 = ssub.s32 64, 64
      %2120 = vsyncadd [#allocation4], %s2119
      %s2122 = sshll.u32 [#allocation11], 4
      %s2123 = int_to_ptr.vmem [resolvable:$true] %s2122
      %2125 = dma.vmem_to_hbm [thread:$0]  %s2123, 64, %s7, [#allocation4]
    $region53: #{tpu_custom_call.1} parent=1 // pred_fallthru
      _
    // Predicated region
    $region54: #{tpu_custom_call.1} parent=1 // pred_check
      _
    $region55: #{tpu_custom_call.1} parent=1 // pred_check_branch
      %2127 = sbr.rel (0) target = $region57
    $region56: #{tpu_custom_call.1} parent=1 // pred_region
      %2128 = dma.done [#allocation4], 64
    $region57: #{tpu_custom_call.1} parent=1 // pred_fallthru
      _
    %2129 = vsyncpa [#allocation3], 1
    %2130 = vsyncpa [#allocation6], 1
    %2131 = vsyncpa [#allocation9], 1
    %2132 = vsyncpa [#allocation4], 1

</llo_original>
